<compile_context>
chip_gen: v6e
topology: v6e:2x2x1
jax: 0.10.0
libtpu: 0.0.40
codegen_flags: <defaults>
</compile_context>

<pallas_src>
import jax
import jax.numpy as jnp
from jax.experimental import pallas as pl
from jax.experimental.pallas import tpu as pltpu

D_IN, D_H1, D_H2, D_OUT = 1296, 256, 64, 27
D_H2_PAD, D_OUT_PAD = 128, 128   # lane-pad the small dims to a full 128 lanes


def _round_up(n, m):
    return ((n + m - 1) // m) * m


def keynet_kernel(x_ref, w1_ref, b1_ref, w2_ref, b2_ref, w3_ref, b3_ref, o_ref):
    # x arrives as f32; cast to bf16 in-kernel so the wrapper doesn't add an
    # un-overlapped full-HBM cast pass in front of the kernel.
    x = x_ref[...].astype(jnp.bfloat16)
    # fc1 + ReLU  (bf16 x bf16 -> f32 accumulation on the MXU)
    h = jnp.dot(x, w1_ref[...], preferred_element_type=jnp.float32)
    h = jnp.maximum(h + b1_ref[...], 0.0)
    # fc2 + ReLU  (hidden padded 64 -> 128; padded cols/bias are zero, relu(0)=0)
    h = jnp.dot(h.astype(jnp.bfloat16), w2_ref[...],
                preferred_element_type=jnp.float32)
    h = jnp.maximum(h + b2_ref[...], 0.0)
    # fc3, no activation  (output padded 27 -> 128, sliced off in the wrapper)
    out = jnp.dot(h.astype(jnp.bfloat16), w3_ref[...],
                  preferred_element_type=jnp.float32)
    o_ref[...] = (out + b3_ref[...]).astype(o_ref.dtype)


def keynet_forward(x, params, *, tb=512):
    """x: [B, 1296] float32.  params: lane-padded bf16 weights + f32 biases.

    Returns [B, 27] float32.
    """
    B = x.shape[0]
    w1, b1, w2, b2, w3, b3 = (
        params["w1"], params["b1"], params["w2"],
        params["b2"], params["w3"], params["b3"],
    )

    # Batch tile: multiple of 16, capped at tb.  Small batches -> one grid
    # step (no forced split); large batches -> multiple "parallel" grid steps.
    tb_eff = min(tb, _round_up(max(B, 16), 16))
    Bp = _round_up(B, tb_eff)

    xf = x.astype(jnp.float32)          # no-op if already f32
    if Bp != B:
        xf = jnp.pad(xf, ((0, Bp - B), (0, 0)))

    grid = (Bp // tb_eff,)
    full = lambda i: (0, 0)   # weights/biases: same full block every grid step

    out = pl.pallas_call(
        keynet_kernel,
        out_shape=jax.ShapeDtypeStruct((Bp, D_OUT_PAD), jnp.float32),
        grid_spec=pltpu.PrefetchScalarGridSpec(
            num_scalar_prefetch=0,
            grid=grid,
            in_specs=[
                pl.BlockSpec((tb_eff, D_IN), lambda i: (i, 0)),    # x tile (f32)
                pl.BlockSpec((D_IN, D_H1), full),                  # W1
                pl.BlockSpec((1, D_H1), full),                     # b1
                pl.BlockSpec((D_H1, D_H2_PAD), full),              # W2 (padded)
                pl.BlockSpec((1, D_H2_PAD), full),                 # b2 (padded)
                pl.BlockSpec((D_H2_PAD, D_OUT_PAD), full),         # W3 (padded)
                pl.BlockSpec((1, D_OUT_PAD), full),                # b3 (padded)
            ],
            out_specs=pl.BlockSpec((tb_eff, D_OUT_PAD), lambda i: (i, 0)),
        ),
        compiler_params=pltpu.CompilerParams(
            dimension_semantics=("parallel",),
        ),
    )(xf, w1, b1, w2, b2, w3, b3)

    return out[:B, :D_OUT]


def init_params(key):
    """Deterministic synthetic init (PyTorch-Linear-style uniform bounds),
    zero-padded to lane-aligned shapes; weights bf16, biases f32."""
    ks = jax.random.split(key, 6)

    def linear(kw, kb, fan_in, fan_out, pad_in, pad_out):
        bound = float(1.0 / (fan_in ** 0.5))
        # stored as [in, out] == PyTorch weight [out, in] transposed
        w = jax.random.uniform(kw, (fan_in, fan_out), jnp.float32, -bound, bound)
        b = jax.random.uniform(kb, (1, fan_out), jnp.float32, -bound, bound)
        w = jnp.pad(w, ((0, pad_in - fan_in), (0, pad_out - fan_out)))
        b = jnp.pad(b, ((0, 0), (0, pad_out - fan_out)))
        return w.astype(jnp.bfloat16), b

    w1, b1 = linear(ks[0], ks[1], D_IN, D_H1, D_IN, D_H1)
    w2, b2 = linear(ks[2], ks[3], D_H1, D_H2, D_H1, D_H2_PAD)
    w3, b3 = linear(ks[4], ks[5], D_H2, D_OUT, D_H2_PAD, D_OUT_PAD)
    return {"w1": w1, "b1": b1, "w2": w2, "b2": b2, "w3": w3, "b3": b3}


def keynet_ref(x, p):
    """Pure-JAX reference with the same bf16-input / f32-accumulate numerics."""
    h = jnp.dot(x.astype(jnp.bfloat16), p["w1"],
                preferred_element_type=jnp.float32)
    h = jax.nn.relu(h + p["b1"])
    h = jnp.dot(h.astype(jnp.bfloat16), p["w2"],
                preferred_element_type=jnp.float32)
    h = jax.nn.relu(h + p["b2"])
    out = jnp.dot(h.astype(jnp.bfloat16), p["w3"],
                  preferred_element_type=jnp.float32) + p["b3"]
    return out[:, :D_OUT]


if __name__ == "__main__":
    key = jax.random.PRNGKey(0)
    k_x, k_p = jax.random.split(key)

    B = 40  # deliberately NOT a multiple of 16: exercises batch tile rounding
    x = jax.random.normal(k_x, (B, D_IN), dtype=jnp.float32)
    params = init_params(k_p)

    out = keynet_forward(x, params)
    out = jax.block_until_ready(out)

    ref = keynet_ref(x, params)
    assert out.shape == (B, D_OUT), out.shape
    max_err = float(jnp.max(jnp.abs(out - ref)))
    assert jnp.allclose(out, ref, atol=2e-3, rtol=2e-3), max_err

    print("KERNEL_OK")
</pallas_src>

<mosaic_0001>
module attributes {stable_mosaic.version = 11 : i64} {
  func.func @keynet_kernel(%arg0: i32, %arg1: memref<48x1296xf32, #tpu.memory_space<vmem>>, %arg2: memref<1296x256xbf16, #tpu.memory_space<vmem>>, %arg3: memref<1x256xf32, #tpu.memory_space<vmem>>, %arg4: memref<256x128xbf16, #tpu.memory_space<vmem>>, %arg5: memref<1x128xf32, #tpu.memory_space<vmem>>, %arg6: memref<128x128xbf16, #tpu.memory_space<vmem>>, %arg7: memref<1x128xf32, #tpu.memory_space<vmem>>, %arg8: memref<48x128xf32, #tpu.memory_space<vmem>>) attributes {dimension_semantics = [#tpu.dimension_semantics<parallel>], iteration_bounds = array<i64: 1>, scalar_prefetch = 0 : i64, scratch_operands = 0 : i64, tpu.core_type = #tpu.core_type<tc>, window_params = [{transform_indices = @transform_0, window_bounds = array<i64: 48, 1296>}, {pipeline_mode = #tpu.pipeline_mode<synchronous>, transform_indices = @transform_1, window_bounds = array<i64: 1296, 256>}, {pipeline_mode = #tpu.pipeline_mode<synchronous>, transform_indices = @transform_2, window_bounds = array<i64: 1, 256>}, {pipeline_mode = #tpu.pipeline_mode<synchronous>, transform_indices = @transform_3, window_bounds = array<i64: 256, 128>}, {pipeline_mode = #tpu.pipeline_mode<synchronous>, transform_indices = @transform_4, window_bounds = array<i64: 1, 128>}, {pipeline_mode = #tpu.pipeline_mode<synchronous>, transform_indices = @transform_5, window_bounds = array<i64: 128, 128>}, {pipeline_mode = #tpu.pipeline_mode<synchronous>, transform_indices = @transform_6, window_bounds = array<i64: 1, 128>}, {transform_indices = @transform_7, window_bounds = array<i64: 48, 128>}]} {
    %c0 = arith.constant 0 : index
    %c0_0 = arith.constant 0 : index
    %0 = vector.load %arg1[%c0, %c0_0] : memref<48x1296xf32, #tpu.memory_space<vmem>>, vector<48x1296xf32>
    %1 = arith.truncf %0 : vector<48x1296xf32> to vector<48x1296xbf16>
    %c0_1 = arith.constant 0 : index
    %c0_2 = arith.constant 0 : index
    %2 = vector.load %arg2[%c0_1, %c0_2] : memref<1296x256xbf16, #tpu.memory_space<vmem>>, vector<1296x256xbf16>
    %cst = arith.constant dense<0.000000e+00> : vector<48x256xf32>
    %3 = tpu.matmul %1, %2, %cst {dimension_numbers = #tpu.dot_dimension_numbers<[1], [0], [0], [1], [0, 0, 1, 1], [], []>} : vector<48x1296xbf16>, vector<1296x256xbf16>, vector<48x256xf32> -> vector<48x256xf32>
    %c0_3 = arith.constant 0 : index
    %c0_4 = arith.constant 0 : index
    %4 = vector.load %arg3[%c0_3, %c0_4] : memref<1x256xf32, #tpu.memory_space<vmem>>, vector<1x256xf32>
    %5 = vector.broadcast %4 : vector<1x256xf32> to vector<48x256xf32>
    %6 = arith.addf %3, %5 : vector<48x256xf32>
    %cst_5 = arith.constant 0.000000e+00 : f32
    %7 = vector.broadcast %cst_5 : f32 to vector<48x256xf32>
    %8 = arith.maximumf %6, %7 : vector<48x256xf32>
    %9 = arith.truncf %8 : vector<48x256xf32> to vector<48x256xbf16>
    %c0_6 = arith.constant 0 : index
    %c0_7 = arith.constant 0 : index
    %10 = vector.load %arg4[%c0_6, %c0_7] : memref<256x128xbf16, #tpu.memory_space<vmem>>, vector<256x128xbf16>
    %cst_8 = arith.constant dense<0.000000e+00> : vector<48x128xf32>
    %11 = tpu.matmul %9, %10, %cst_8 {dimension_numbers = #tpu.dot_dimension_numbers<[1], [0], [0], [1], [0, 0, 1, 1], [], []>} : vector<48x256xbf16>, vector<256x128xbf16>, vector<48x128xf32> -> vector<48x128xf32>
    %c0_9 = arith.constant 0 : index
    %c0_10 = arith.constant 0 : index
    %12 = vector.load %arg5[%c0_9, %c0_10] : memref<1x128xf32, #tpu.memory_space<vmem>>, vector<1x128xf32>
    %13 = vector.broadcast %12 : vector<1x128xf32> to vector<48x128xf32>
    %14 = arith.addf %11, %13 : vector<48x128xf32>
    %cst_11 = arith.constant 0.000000e+00 : f32
    %15 = vector.broadcast %cst_11 : f32 to vector<48x128xf32>
    %16 = arith.maximumf %14, %15 : vector<48x128xf32>
    %17 = arith.truncf %16 : vector<48x128xf32> to vector<48x128xbf16>
    %c0_12 = arith.constant 0 : index
    %c0_13 = arith.constant 0 : index
    %18 = vector.load %arg6[%c0_12, %c0_13] : memref<128x128xbf16, #tpu.memory_space<vmem>>, vector<128x128xbf16>
    %cst_14 = arith.constant dense<0.000000e+00> : vector<48x128xf32>
    %19 = tpu.matmul %17, %18, %cst_14 {dimension_numbers = #tpu.dot_dimension_numbers<[1], [0], [0], [1], [0, 0, 1, 1], [], []>} : vector<48x128xbf16>, vector<128x128xbf16>, vector<48x128xf32> -> vector<48x128xf32>
    %c0_15 = arith.constant 0 : index
    %c0_16 = arith.constant 0 : index
    %20 = vector.load %arg7[%c0_15, %c0_16] : memref<1x128xf32, #tpu.memory_space<vmem>>, vector<1x128xf32>
    %21 = vector.broadcast %20 : vector<1x128xf32> to vector<48x128xf32>
    %22 = arith.addf %19, %21 : vector<48x128xf32>
    %c0_17 = arith.constant 0 : index
    %c0_18 = arith.constant 0 : index
    %23 = vector.load %arg8[%c0_17, %c0_18] : memref<48x128xf32, #tpu.memory_space<vmem>>, vector<48x128xf32>
    tpu.vector_store %arg8[%c0_17, %c0_18], %22 {strides = array<i32>} : memref<48x128xf32, #tpu.memory_space<vmem>>, vector<48x128xf32>,
    return
  }
  func.func @transform_0(%arg0: i32) -> (i32, i32) {
    %c0_i32 = arith.constant 0 : i32
    %c0_i32_0 = arith.constant 0 : i32
    return %arg0, %c0_i32 : i32, i32
  }
  func.func @transform_1(%arg0: i32) -> (i32, i32) {
    %c0_i32 = arith.constant 0 : i32
    %c0_i32_0 = arith.constant 0 : i32
    %c0_i32_1 = arith.constant 0 : i32
    return %c0_i32, %c0_i32_0 : i32, i32
  }
  func.func @transform_2(%arg0: i32) -> (i32, i32) {
    %c0_i32 = arith.constant 0 : i32
    %c0_i32_0 = arith.constant 0 : i32
    %c0_i32_1 = arith.constant 0 : i32
    return %c0_i32, %c0_i32_0 : i32, i32
  }
  func.func @transform_3(%arg0: i32) -> (i32, i32) {
    %c0_i32 = arith.constant 0 : i32
    %c0_i32_0 = arith.constant 0 : i32
    %c0_i32_1 = arith.constant 0 : i32
    return %c0_i32, %c0_i32_0 : i32, i32
  }
  func.func @transform_4(%arg0: i32) -> (i32, i32) {
    %c0_i32 = arith.constant 0 : i32
    %c0_i32_0 = arith.constant 0 : i32
    %c0_i32_1 = arith.constant 0 : i32
    return %c0_i32, %c0_i32_0 : i32, i32
  }
  func.func @transform_5(%arg0: i32) -> (i32, i32) {
    %c0_i32 = arith.constant 0 : i32
    %c0_i32_0 = arith.constant 0 : i32
    %c0_i32_1 = arith.constant 0 : i32
    return %c0_i32, %c0_i32_0 : i32, i32
  }
  func.func @transform_6(%arg0: i32) -> (i32, i32) {
    %c0_i32 = arith.constant 0 : i32
    %c0_i32_0 = arith.constant 0 : i32
    %c0_i32_1 = arith.constant 0 : i32
    return %c0_i32, %c0_i32_0 : i32, i32
  }
  func.func @transform_7(%arg0: i32) -> (i32, i32) {
    %c0_i32 = arith.constant 0 : i32
    %c0_i32_0 = arith.constant 0 : i32
    return %arg0, %c0_i32 : i32, i32
  }
}

</mosaic_0001>

<llo_original>
// kernel: tpu_custom_call.1
$region0: #{tpu_custom_call.1}
  #allocation0 [shape = 'u32[]', space=smem, size = 0x4, offset = 0x4, fixed_abs, tag = 'smem constant byte address 0x4 - core index']
  #allocation1 [shape = 'u32[144,128]{1,0:T(1,128)}', space=vmem, size = 0x12000, scoped, tag = 'internal scratch']
  %s0 = inlined_call_operand.hbm [shape: f32[48,1296], index: 0, kind: input, shape index: {}]
  %s1 = inlined_call_operand.hbm [shape: bf16[1296,256], index: 1, kind: input, shape index: {}]
  %s2 = inlined_call_operand.vmem [shape: f32[1,256], index: 2, kind: input, shape index: {}]
  %s3 = inlined_call_operand.hbm [shape: bf16[256,128], index: 3, kind: input, shape index: {}]
  %s4 = inlined_call_operand.vmem [shape: f32[1,128], index: 4, kind: input, shape index: {}]
  %s5 = inlined_call_operand.hbm [shape: bf16[128,128], index: 5, kind: input, shape index: {}]
  %s6 = inlined_call_operand.vmem [shape: f32[1,128], index: 6, kind: input, shape index: {}]
  %s7 = inlined_call_operand.hbm [shape: f32[48,128], index: 7, kind: output, shape index: {}]
  %s8 = sld [smem:[#allocation0]]
  $region54: #{tpu_custom_call.1} parent=0
    _
  %s10 = ssub.s32 1, %s8
  %s11 = scalar_select 0, %s10, %s8
  $region1: #{tpu_custom_call.1} parent=0
    #allocation2 [shape = 'u8[270336]{0}', space=vmem, size = 0x42000, scoped, tag = 'input window, operand 0, single buffered']
    #allocation3 [shape = 's32[1]{0}', space=sflag, size = 0x4, scoped, tag = 'scoped memory for tpu_custom_call.1']
    #allocation4 [shape = 's32[1]{0}', space=sflag, size = 0x4, scoped, tag = 'scoped memory for tpu_custom_call.1']
    #allocation5 [shape = 'u8[663552]{0}', space=vmem, size = 0xa2000, scoped, tag = 'input window, operand 1, single buffered']
    #allocation6 [shape = 's32[1]{0}', space=sflag, size = 0x4, scoped, tag = 'scoped memory for tpu_custom_call.1']
    #allocation7 [shape = 'u8[65536]{0}', space=vmem, size = 0x10000, scoped, tag = 'input window, operand 3, single buffered']
    #allocation8 [shape = 'u8[32768]{0}', space=vmem, size = 0x8000, scoped, tag = 'input window, operand 5, single buffered']
    #allocation9 [shape = 's32[1]{0}', space=sflag, size = 0x4, scoped, tag = 'scoped memory for tpu_custom_call.1']
    #allocation10 [shape = 'u8[24576]{0}', space=vmem, size = 0x6000, scoped, tag = 'output window, operand 0, single buffered']
    %12 = vsyncpa [#allocation3], 0
    %13 = vsyncpa [#allocation6], 0
    %14 = vsyncpa [#allocation9], 0
    %15 = vsyncpa [#allocation4], 0
    // Predicated region
    $region2: #{tpu_custom_call.1} parent=1 // pred_check
      _
    $region3: #{tpu_custom_call.1} parent=1 // pred_check_branch
      %17 = sbr.rel (0) target = $region5
    $region4: #{tpu_custom_call.1} parent=1 // pred_region
      %s19 = ssub.s32 8448, 8448
      %20 = vsyncadd [#allocation3], %s19
      %s21 = sshll.u32 [#allocation2], 4
      %s22 = int_to_ptr.vmem [resolvable:$true] %s21
      %27 = dma.hbm_to_vmem [thread:$0]  %s0, 8448, %s22, [#allocation3], 1408, 1408, 88
    $region5: #{tpu_custom_call.1} parent=1 // pred_fallthru
      _
    // Predicated region
    $region6: #{tpu_custom_call.1} parent=1 // pred_check
      _
    $region7: #{tpu_custom_call.1} parent=1 // pred_check_branch
      %29 = sbr.rel (0) target = $region9
    $region8: #{tpu_custom_call.1} parent=1 // pred_region
      %s31 = ssub.s32 20736, 20736
      %32 = vsyncadd [#allocation6], %s31
      %s33 = sshll.u32 [#allocation5], 4
      %s34 = int_to_ptr.vmem [resolvable:$true] %s33
      %39 = dma.hbm_to_vmem [thread:$0]  %s1, 20736, %s34, [#allocation6], 128, 128, 8
    $region9: #{tpu_custom_call.1} parent=1 // pred_fallthru
      _
    // Predicated region
    $region10: #{tpu_custom_call.1} parent=1 // pred_check
      _
    $region11: #{tpu_custom_call.1} parent=1 // pred_check_branch
      %41 = sbr.rel (0) target = $region13
    $region12: #{tpu_custom_call.1} parent=1 // pred_region
      _
    $region13: #{tpu_custom_call.1} parent=1 // pred_fallthru
      _
    // Predicated region
    $region14: #{tpu_custom_call.1} parent=1 // pred_check
      _
    $region15: #{tpu_custom_call.1} parent=1 // pred_check_branch
      %43 = sbr.rel (0) target = $region17
    $region16: #{tpu_custom_call.1} parent=1 // pred_region
      %s45 = ssub.s32 2048, 2048
      %46 = vsyncadd [#allocation6], %s45
      %s47 = sshll.u32 [#allocation7], 4
      %s48 = int_to_ptr.vmem [resolvable:$true] %s47
      %53 = dma.hbm_to_vmem [thread:$0]  %s3, 2048, %s48, [#allocation6], 64, 64, 4
    $region17: #{tpu_custom_call.1} parent=1 // pred_fallthru
      _
    // Predicated region
    $region18: #{tpu_custom_call.1} parent=1 // pred_check
      _
    $region19: #{tpu_custom_call.1} parent=1 // pred_check_branch
      %55 = sbr.rel (0) target = $region21
    $region20: #{tpu_custom_call.1} parent=1 // pred_region
      _
    $region21: #{tpu_custom_call.1} parent=1 // pred_fallthru
      _
    // Predicated region
    $region22: #{tpu_custom_call.1} parent=1 // pred_check
      _
    $region23: #{tpu_custom_call.1} parent=1 // pred_check_branch
      %57 = sbr.rel (0) target = $region25
    $region24: #{tpu_custom_call.1} parent=1 // pred_region
      %s59 = ssub.s32 1024, 1024
      %60 = vsyncadd [#allocation9], %s59
      %s61 = sshll.u32 [#allocation8], 4
      %s62 = int_to_ptr.vmem [resolvable:$true] %s61
      %67 = dma.hbm_to_vmem [thread:$0]  %s5, 1024, %s62, [#allocation9], 64, 64, 4
    $region25: #{tpu_custom_call.1} parent=1 // pred_fallthru
      _
    // Predicated region
    $region26: #{tpu_custom_call.1} parent=1 // pred_check
      _
    $region27: #{tpu_custom_call.1} parent=1 // pred_check_branch
      %69 = sbr.rel (0) target = $region29
    $region28: #{tpu_custom_call.1} parent=1 // pred_region
      _
    $region29: #{tpu_custom_call.1} parent=1 // pred_fallthru
      _
    // Predicated region
    $region30: #{tpu_custom_call.1} parent=1 // pred_check
      _
    $region31: #{tpu_custom_call.1} parent=1 // pred_check_branch
      %71 = sbr.rel (0) target = $region33
    $region32: #{tpu_custom_call.1} parent=1 // pred_region
      %72 = dma.done [#allocation3], 8448
    $region33: #{tpu_custom_call.1} parent=1 // pred_fallthru
      _
    // Predicated region
    $region34: #{tpu_custom_call.1} parent=1 // pred_check
      _
    $region35: #{tpu_custom_call.1} parent=1 // pred_check_branch
      %74 = sbr.rel (0) target = $region37
    $region36: #{tpu_custom_call.1} parent=1 // pred_region
      %75 = dma.done [#allocation6], 20736
    $region37: #{tpu_custom_call.1} parent=1 // pred_fallthru
      _
    // Predicated region
    $region38: #{tpu_custom_call.1} parent=1 // pred_check
      _
    $region39: #{tpu_custom_call.1} parent=1 // pred_check_branch
      %77 = sbr.rel (0) target = $region41
    $region40: #{tpu_custom_call.1} parent=1 // pred_region
      %78 = dma.done [#allocation6], 2048
    $region41: #{tpu_custom_call.1} parent=1 // pred_fallthru
      _
    // Predicated region
    $region42: #{tpu_custom_call.1} parent=1 // pred_check
      _
    $region43: #{tpu_custom_call.1} parent=1 // pred_check_branch
      %80 = sbr.rel (0) target = $region45
    $region44: #{tpu_custom_call.1} parent=1 // pred_region
      %81 = dma.done [#allocation9], 1024
    $region45: #{tpu_custom_call.1} parent=1 // pred_fallthru
      _
    %v83 = vld [vmem:[#allocation2] sm:$0xff]
    %v84 = vld [vmem:[#allocation2 + $0x8] sm:$0xff]
    %v85 = vld [vmem:[#allocation2 + $0x10] sm:$0xff]
    %v86 = vld [vmem:[#allocation2 + $0x18] sm:$0xff]
    %v87 = vld [vmem:[#allocation2 + $0x20] sm:$0xff]
    %v88 = vld [vmem:[#allocation2 + $0x28] sm:$0xff]
    %v89 = vld [vmem:[#allocation2 + $0x30] sm:$0xff]
    %v90 = vld [vmem:[#allocation2 + $0x38] sm:$0xff]
    %v91 = vld [vmem:[#allocation2 + $0x40] sm:$0xff]
    %v92 = vld [vmem:[#allocation2 + $0x48] sm:$0xff]
    %v93 = vld [vmem:[#allocation2 + $0x50] sm:$0xff]
    %v94 = vld [vmem:[#allocation2 + $0x58] sm:$0xff]
    %v95 = vld [vmem:[#allocation2 + $0x60] sm:$0xff]
    %v96 = vld [vmem:[#allocation2 + $0x68] sm:$0xff]
    %v97 = vld [vmem:[#allocation2 + $0x70] sm:$0xff]
    %v98 = vld [vmem:[#allocation2 + $0x78] sm:$0xff]
    %v99 = vld [vmem:[#allocation2 + $0x80] sm:$0xff]
    %v100 = vld [vmem:[#allocation2 + $0x88] sm:$0xff]
    %v101 = vld [vmem:[#allocation2 + $0x90] sm:$0xff]
    %v102 = vld [vmem:[#allocation2 + $0x98] sm:$0xff]
    %v103 = vld [vmem:[#allocation2 + $0xa0] sm:$0xff]
    %v104 = vld [vmem:[#allocation2 + $0xa8] sm:$0xff]
    %v105 = vld [vmem:[#allocation2 + $0xb0] sm:$0xff]
    %v106 = vld [vmem:[#allocation2 + $0xb8] sm:$0xff]
    %v107 = vld [vmem:[#allocation2 + $0xc0] sm:$0xff]
    %v108 = vld [vmem:[#allocation2 + $0xc8] sm:$0xff]
    %v109 = vld [vmem:[#allocation2 + $0xd0] sm:$0xff]
    %v110 = vld [vmem:[#allocation2 + $0xd8] sm:$0xff]
    %v111 = vld [vmem:[#allocation2 + $0xe0] sm:$0xff]
    %v112 = vld [vmem:[#allocation2 + $0xe8] sm:$0xff]
    %v113 = vld [vmem:[#allocation2 + $0xf0] sm:$0xff]
    %v114 = vld [vmem:[#allocation2 + $0xf8] sm:$0xff]
    %v115 = vld [vmem:[#allocation2 + $0x100] sm:$0xff]
    %v116 = vld [vmem:[#allocation2 + $0x108] sm:$0xff]
    %v117 = vld [vmem:[#allocation2 + $0x110] sm:$0xff]
    %v118 = vld [vmem:[#allocation2 + $0x118] sm:$0xff]
    %v119 = vld [vmem:[#allocation2 + $0x120] sm:$0xff]
    %v120 = vld [vmem:[#allocation2 + $0x128] sm:$0xff]
    %v121 = vld [vmem:[#allocation2 + $0x130] sm:$0xff]
    %v122 = vld [vmem:[#allocation2 + $0x138] sm:$0xff]
    %v123 = vld [vmem:[#allocation2 + $0x140] sm:$0xff]
    %v124 = vld [vmem:[#allocation2 + $0x148] sm:$0xff]
    %v125 = vld [vmem:[#allocation2 + $0x150] sm:$0xff]
    %v126 = vld [vmem:[#allocation2 + $0x158] sm:$0xff]
    %v127 = vld [vmem:[#allocation2 + $0x160] sm:$0xff]
    %v128 = vld [vmem:[#allocation2 + $0x168] sm:$0xff]
    %v129 = vld [vmem:[#allocation2 + $0x170] sm:$0xff]
    %v130 = vld [vmem:[#allocation2 + $0x178] sm:$0xff]
    %v131 = vld [vmem:[#allocation2 + $0x180] sm:$0xff]
    %v132 = vld [vmem:[#allocation2 + $0x188] sm:$0xff]
    %v133 = vld [vmem:[#allocation2 + $0x190] sm:$0xff]
    %v134 = vld [vmem:[#allocation2 + $0x198] sm:$0xff]
    %v135 = vld [vmem:[#allocation2 + $0x1a0] sm:$0xff]
    %v136 = vld [vmem:[#allocation2 + $0x1a8] sm:$0xff]
    %v137 = vld [vmem:[#allocation2 + $0x1b0] sm:$0xff]
    %v138 = vld [vmem:[#allocation2 + $0x1b8] sm:$0xff]
    %v139 = vld [vmem:[#allocation2 + $0x1c0] sm:$0xff]
    %v140 = vld [vmem:[#allocation2 + $0x1c8] sm:$0xff]
    %v141 = vld [vmem:[#allocation2 + $0x1d0] sm:$0xff]
    %v142 = vld [vmem:[#allocation2 + $0x1d8] sm:$0xff]
    %v143 = vld [vmem:[#allocation2 + $0x1e0] sm:$0xff]
    %v144 = vld [vmem:[#allocation2 + $0x1e8] sm:$0xff]
    %v145 = vld [vmem:[#allocation2 + $0x1f0] sm:$0xff]
    %v146 = vld [vmem:[#allocation2 + $0x1f8] sm:$0xff]
    %v147 = vld [vmem:[#allocation2 + $0x200] sm:$0xff]
    %v148 = vld [vmem:[#allocation2 + $0x208] sm:$0xff]
    %v149 = vpack.c.bf16 %v94, %v83
    %v150 = vpack.c.bf16 %v95, %v84
    %v151 = vpack.c.bf16 %v96, %v85
    %v152 = vpack.c.bf16 %v97, %v86
    %v153 = vpack.c.bf16 %v98, %v87
    %v154 = vpack.c.bf16 %v99, %v88
    %v155 = vpack.c.bf16 %v100, %v89
    %v156 = vpack.c.bf16 %v101, %v90
    %v157 = vpack.c.bf16 %v102, %v91
    %v158 = vpack.c.bf16 %v103, %v92
    %v159 = vpack.c.bf16 %v104, %v93
    %v160 = vpack.c.bf16 %v116, %v105
    %v161 = vpack.c.bf16 %v117, %v106
    %v162 = vpack.c.bf16 %v118, %v107
    %v163 = vpack.c.bf16 %v119, %v108
    %v164 = vpack.c.bf16 %v120, %v109
    %v165 = vpack.c.bf16 %v121, %v110
    %v166 = vpack.c.bf16 %v122, %v111
    %v167 = vpack.c.bf16 %v123, %v112
    %v168 = vpack.c.bf16 %v124, %v113
    %v169 = vpack.c.bf16 %v125, %v114
    %v170 = vpack.c.bf16 %v126, %v115
    %v171 = vpack.c.bf16 %v138, %v127
    %v172 = vpack.c.bf16 %v139, %v128
    %v173 = vpack.c.bf16 %v140, %v129
    %v174 = vpack.c.bf16 %v141, %v130
    %v175 = vpack.c.bf16 %v142, %v131
    %v176 = vpack.c.bf16 %v143, %v132
    %v177 = vpack.c.bf16 %v144, %v133
    %v178 = vpack.c.bf16 %v145, %v134
    %v179 = vpack.c.bf16 %v146, %v135
    %v180 = vpack.c.bf16 %v147, %v136
    %v181 = vpack.c.bf16 %v148, %v137
    %v182 = vld [vmem:[#allocation5] sm:$0xff]
    %v183 = vld [vmem:[#allocation5 + $0x8] sm:$0xff]
    %v184 = vld [vmem:[#allocation5 + $0x10] sm:$0xff]
    %v185 = vld [vmem:[#allocation5 + $0x18] sm:$0xff]
    %v186 = vld [vmem:[#allocation5 + $0x20] sm:$0xff]
    %v187 = vld [vmem:[#allocation5 + $0x28] sm:$0xff]
    %v188 = vld [vmem:[#allocation5 + $0x30] sm:$0xff]
    %v189 = vld [vmem:[#allocation5 + $0x38] sm:$0xff]
    %v190 = vld [vmem:[#allocation5 + $0x40] sm:$0xff]
    %v191 = vld [vmem:[#allocation5 + $0x48] sm:$0xff]
    %v192 = vld [vmem:[#allocation5 + $0x50] sm:$0xff]
    %v193 = vld [vmem:[#allocation5 + $0x58] sm:$0xff]
    %v194 = vld [vmem:[#allocation5 + $0x60] sm:$0xff]
    %v195 = vld [vmem:[#allocation5 + $0x68] sm:$0xff]
    %v196 = vld [vmem:[#allocation5 + $0x70] sm:$0xff]
    %v197 = vld [vmem:[#allocation5 + $0x78] sm:$0xff]
    %v198 = vld [vmem:[#allocation5 + $0x80] sm:$0xff]
    %v199 = vld [vmem:[#allocation5 + $0x88] sm:$0xff]
    %v200 = vld [vmem:[#allocation5 + $0x90] sm:$0xff]
    %v201 = vld [vmem:[#allocation5 + $0x98] sm:$0xff]
    %v202 = vld [vmem:[#allocation5 + $0xa0] sm:$0xff]
    %v203 = vld [vmem:[#allocation5 + $0xa8] sm:$0xff]
    %v204 = vld [vmem:[#allocation5 + $0xb0] sm:$0xff]
    %v205 = vld [vmem:[#allocation5 + $0xb8] sm:$0xff]
    %v206 = vld [vmem:[#allocation5 + $0xc0] sm:$0xff]
    %v207 = vld [vmem:[#allocation5 + $0xc8] sm:$0xff]
    %v208 = vld [vmem:[#allocation5 + $0xd0] sm:$0xff]
    %v209 = vld [vmem:[#allocation5 + $0xd8] sm:$0xff]
    %v210 = vld [vmem:[#allocation5 + $0xe0] sm:$0xff]
    %v211 = vld [vmem:[#allocation5 + $0xe8] sm:$0xff]
    %v212 = vld [vmem:[#allocation5 + $0xf0] sm:$0xff]
    %v213 = vld [vmem:[#allocation5 + $0xf8] sm:$0xff]
    %v214 = vld [vmem:[#allocation5 + $0x100] sm:$0xff]
    %v215 = vld [vmem:[#allocation5 + $0x108] sm:$0xff]
    %v216 = vld [vmem:[#allocation5 + $0x110] sm:$0xff]
    %v217 = vld [vmem:[#allocation5 + $0x118] sm:$0xff]
    %v218 = vld [vmem:[#allocation5 + $0x120] sm:$0xff]
    %v219 = vld [vmem:[#allocation5 + $0x128] sm:$0xff]
    %v220 = vld [vmem:[#allocation5 + $0x130] sm:$0xff]
    %v221 = vld [vmem:[#allocation5 + $0x138] sm:$0xff]
    %v222 = vld [vmem:[#allocation5 + $0x140] sm:$0xff]
    %v223 = vld [vmem:[#allocation5 + $0x148] sm:$0xff]
    %v224 = vld [vmem:[#allocation5 + $0x150] sm:$0xff]
    %v225 = vld [vmem:[#allocation5 + $0x158] sm:$0xff]
    %v226 = vld [vmem:[#allocation5 + $0x160] sm:$0xff]
    %v227 = vld [vmem:[#allocation5 + $0x168] sm:$0xff]
    %v228 = vld [vmem:[#allocation5 + $0x170] sm:$0xff]
    %v229 = vld [vmem:[#allocation5 + $0x178] sm:$0xff]
    %v230 = vld [vmem:[#allocation5 + $0x180] sm:$0xff]
    %v231 = vld [vmem:[#allocation5 + $0x188] sm:$0xff]
    %v232 = vld [vmem:[#allocation5 + $0x190] sm:$0xff]
    %v233 = vld [vmem:[#allocation5 + $0x198] sm:$0xff]
    %v234 = vld [vmem:[#allocation5 + $0x1a0] sm:$0xff]
    %v235 = vld [vmem:[#allocation5 + $0x1a8] sm:$0xff]
    %v236 = vld [vmem:[#allocation5 + $0x1b0] sm:$0xff]
    %v237 = vld [vmem:[#allocation5 + $0x1b8] sm:$0xff]
    %v238 = vld [vmem:[#allocation5 + $0x1c0] sm:$0xff]
    %v239 = vld [vmem:[#allocation5 + $0x1c8] sm:$0xff]
    %v240 = vld [vmem:[#allocation5 + $0x1d0] sm:$0xff]
    %v241 = vld [vmem:[#allocation5 + $0x1d8] sm:$0xff]
    %v242 = vld [vmem:[#allocation5 + $0x1e0] sm:$0xff]
    %v243 = vld [vmem:[#allocation5 + $0x1e8] sm:$0xff]
    %v244 = vld [vmem:[#allocation5 + $0x1f0] sm:$0xff]
    %v245 = vld [vmem:[#allocation5 + $0x1f8] sm:$0xff]
    %v246 = vld [vmem:[#allocation5 + $0x200] sm:$0xff]
    %v247 = vld [vmem:[#allocation5 + $0x208] sm:$0xff]
    %v248 = vld [vmem:[#allocation5 + $0x210] sm:$0xff]
    %v249 = vld [vmem:[#allocation5 + $0x218] sm:$0xff]
    %v250 = vld [vmem:[#allocation5 + $0x220] sm:$0xff]
    %v251 = vld [vmem:[#allocation5 + $0x228] sm:$0xff]
    %v252 = vld [vmem:[#allocation5 + $0x230] sm:$0xff]
    %v253 = vld [vmem:[#allocation5 + $0x238] sm:$0xff]
    %v254 = vld [vmem:[#allocation5 + $0x240] sm:$0xff]
    %v255 = vld [vmem:[#allocation5 + $0x248] sm:$0xff]
    %v256 = vld [vmem:[#allocation5 + $0x250] sm:$0xff]
    %v257 = vld [vmem:[#allocation5 + $0x258] sm:$0xff]
    %v258 = vld [vmem:[#allocation5 + $0x260] sm:$0xff]
    %v259 = vld [vmem:[#allocation5 + $0x268] sm:$0xff]
    %v260 = vld [vmem:[#allocation5 + $0x270] sm:$0xff]
    %v261 = vld [vmem:[#allocation5 + $0x278] sm:$0xff]
    %v262 = vld [vmem:[#allocation5 + $0x280] sm:$0xff]
    %v263 = vld [vmem:[#allocation5 + $0x288] sm:$0xff]
    %v264 = vld [vmem:[#allocation5 + $0x290] sm:$0xff]
    %v265 = vld [vmem:[#allocation5 + $0x298] sm:$0xff]
    %v266 = vld [vmem:[#allocation5 + $0x2a0] sm:$0xff]
    %v267 = vld [vmem:[#allocation5 + $0x2a8] sm:$0xff]
    %v268 = vld [vmem:[#allocation5 + $0x2b0] sm:$0xff]
    %v269 = vld [vmem:[#allocation5 + $0x2b8] sm:$0xff]
    %v270 = vld [vmem:[#allocation5 + $0x2c0] sm:$0xff]
    %v271 = vld [vmem:[#allocation5 + $0x2c8] sm:$0xff]
    %v272 = vld [vmem:[#allocation5 + $0x2d0] sm:$0xff]
    %v273 = vld [vmem:[#allocation5 + $0x2d8] sm:$0xff]
    %v274 = vld [vmem:[#allocation5 + $0x2e0] sm:$0xff]
    %v275 = vld [vmem:[#allocation5 + $0x2e8] sm:$0xff]
    %v276 = vld [vmem:[#allocation5 + $0x2f0] sm:$0xff]
    %v277 = vld [vmem:[#allocation5 + $0x2f8] sm:$0xff]
    %v278 = vld [vmem:[#allocation5 + $0x300] sm:$0xff]
    %v279 = vld [vmem:[#allocation5 + $0x308] sm:$0xff]
    %v280 = vld [vmem:[#allocation5 + $0x310] sm:$0xff]
    %v281 = vld [vmem:[#allocation5 + $0x318] sm:$0xff]
    %v282 = vld [vmem:[#allocation5 + $0x320] sm:$0xff]
    %v283 = vld [vmem:[#allocation5 + $0x328] sm:$0xff]
    %v284 = vld [vmem:[#allocation5 + $0x330] sm:$0xff]
    %v285 = vld [vmem:[#allocation5 + $0x338] sm:$0xff]
    %v286 = vld [vmem:[#allocation5 + $0x340] sm:$0xff]
    %v287 = vld [vmem:[#allocation5 + $0x348] sm:$0xff]
    %v288 = vld [vmem:[#allocation5 + $0x350] sm:$0xff]
    %v289 = vld [vmem:[#allocation5 + $0x358] sm:$0xff]
    %v290 = vld [vmem:[#allocation5 + $0x360] sm:$0xff]
    %v291 = vld [vmem:[#allocation5 + $0x368] sm:$0xff]
    %v292 = vld [vmem:[#allocation5 + $0x370] sm:$0xff]
    %v293 = vld [vmem:[#allocation5 + $0x378] sm:$0xff]
    %v294 = vld [vmem:[#allocation5 + $0x380] sm:$0xff]
    %v295 = vld [vmem:[#allocation5 + $0x388] sm:$0xff]
    %v296 = vld [vmem:[#allocation5 + $0x390] sm:$0xff]
    %v297 = vld [vmem:[#allocation5 + $0x398] sm:$0xff]
    %v298 = vld [vmem:[#allocation5 + $0x3a0] sm:$0xff]
    %v299 = vld [vmem:[#allocation5 + $0x3a8] sm:$0xff]
    %v300 = vld [vmem:[#allocation5 + $0x3b0] sm:$0xff]
    %v301 = vld [vmem:[#allocation5 + $0x3b8] sm:$0xff]
    %v302 = vld [vmem:[#allocation5 + $0x3c0] sm:$0xff]
    %v303 = vld [vmem:[#allocation5 + $0x3c8] sm:$0xff]
    %v304 = vld [vmem:[#allocation5 + $0x3d0] sm:$0xff]
    %v305 = vld [vmem:[#allocation5 + $0x3d8] sm:$0xff]
    %v306 = vld [vmem:[#allocation5 + $0x3e0] sm:$0xff]
    %v307 = vld [vmem:[#allocation5 + $0x3e8] sm:$0xff]
    %v308 = vld [vmem:[#allocation5 + $0x3f0] sm:$0xff]
    %v309 = vld [vmem:[#allocation5 + $0x3f8] sm:$0xff]
    %v310 = vld [vmem:[#allocation5 + $0x400] sm:$0xff]
    %v311 = vld [vmem:[#allocation5 + $0x408] sm:$0xff]
    %v312 = vld [vmem:[#allocation5 + $0x410] sm:$0xff]
    %v313 = vld [vmem:[#allocation5 + $0x418] sm:$0xff]
    %v314 = vld [vmem:[#allocation5 + $0x420] sm:$0xff]
    %v315 = vld [vmem:[#allocation5 + $0x428] sm:$0xff]
    %v316 = vld [vmem:[#allocation5 + $0x430] sm:$0xff]
    %v317 = vld [vmem:[#allocation5 + $0x438] sm:$0xff]
    %v318 = vld [vmem:[#allocation5 + $0x440] sm:$0xff]
    %v319 = vld [vmem:[#allocation5 + $0x448] sm:$0xff]
    %v320 = vld [vmem:[#allocation5 + $0x450] sm:$0xff]
    %v321 = vld [vmem:[#allocation5 + $0x458] sm:$0xff]
    %v322 = vld [vmem:[#allocation5 + $0x460] sm:$0xff]
    %v323 = vld [vmem:[#allocation5 + $0x468] sm:$0xff]
    %v324 = vld [vmem:[#allocation5 + $0x470] sm:$0xff]
    %v325 = vld [vmem:[#allocation5 + $0x478] sm:$0xff]
    %v326 = vld [vmem:[#allocation5 + $0x480] sm:$0xff]
    %v327 = vld [vmem:[#allocation5 + $0x488] sm:$0xff]
    %v328 = vld [vmem:[#allocation5 + $0x490] sm:$0xff]
    %v329 = vld [vmem:[#allocation5 + $0x498] sm:$0xff]
    %v330 = vld [vmem:[#allocation5 + $0x4a0] sm:$0xff]
    %v331 = vld [vmem:[#allocation5 + $0x4a8] sm:$0xff]
    %v332 = vld [vmem:[#allocation5 + $0x4b0] sm:$0xff]
    %v333 = vld [vmem:[#allocation5 + $0x4b8] sm:$0xff]
    %v334 = vld [vmem:[#allocation5 + $0x4c0] sm:$0xff]
    %v335 = vld [vmem:[#allocation5 + $0x4c8] sm:$0xff]
    %v336 = vld [vmem:[#allocation5 + $0x4d0] sm:$0xff]
    %v337 = vld [vmem:[#allocation5 + $0x4d8] sm:$0xff]
    %v338 = vld [vmem:[#allocation5 + $0x4e0] sm:$0xff]
    %v339 = vld [vmem:[#allocation5 + $0x4e8] sm:$0xff]
    %v340 = vld [vmem:[#allocation5 + $0x4f0] sm:$0xff]
    %v341 = vld [vmem:[#allocation5 + $0x4f8] sm:$0xff]
    %v342 = vld [vmem:[#allocation5 + $0x500] sm:$0xff]
    %v343 = vld [vmem:[#allocation5 + $0x508] sm:$0xff]
    %v344 = vld [vmem:[%s2] sm:$0x3]
    %v346 = vlaneseq
    %v347 = vshrl.u32 %v346, 7
    %v348 = vsub.s32 0, %v347
    %v349 = vrot.slane %v344, %v348
    %v350 = vlaneseq
    %v351 = vshrl.u32 %v350, 7
    %v352 = vsub.s32 1, %v351
    %v353 = vrot.slane %v344, %v352
    %v518 = vunpack.c.l.b16 %v182
    %v519 = vunpack.c.h.b16 %v182
    %v520 = vunpack.c.l.b16 %v183
    %v521 = vunpack.c.h.b16 %v183
    %v522 = vunpack.c.l.b16 %v184
    %v523 = vunpack.c.h.b16 %v184
    %v524 = vunpack.c.l.b16 %v185
    %v525 = vunpack.c.h.b16 %v185
    %v526 = vunpack.c.l.b16 %v186
    %v527 = vunpack.c.h.b16 %v186
    %v528 = vunpack.c.l.b16 %v187
    %v529 = vunpack.c.h.b16 %v187
    %v530 = vunpack.c.l.b16 %v188
    %v531 = vunpack.c.h.b16 %v188
    %v532 = vunpack.c.l.b16 %v189
    %v533 = vunpack.c.h.b16 %v189
    %v534 = vunpack.c.l.b16 %v190
    %v535 = vunpack.c.h.b16 %v190
    %v536 = vunpack.c.l.b16 %v191
    %v537 = vunpack.c.h.b16 %v191
    %v538 = vunpack.c.l.b16 %v192
    %v539 = vunpack.c.h.b16 %v192
    %v540 = vunpack.c.l.b16 %v193
    %v541 = vunpack.c.h.b16 %v193
    %v542 = vunpack.c.l.b16 %v194
    %v543 = vunpack.c.h.b16 %v194
    %v544 = vunpack.c.l.b16 %v195
    %v545 = vunpack.c.h.b16 %v195
    %v546 = vunpack.c.l.b16 %v196
    %v547 = vunpack.c.h.b16 %v196
    %v548 = vunpack.c.l.b16 %v197
    %v549 = vunpack.c.h.b16 %v197
    %v550 = vunpack.c.l.b16 %v198
    %v551 = vunpack.c.h.b16 %v198
    %v552 = vunpack.c.l.b16 %v199
    %v553 = vunpack.c.h.b16 %v199
    %v554 = vunpack.c.l.b16 %v200
    %v555 = vunpack.c.h.b16 %v200
    %v556 = vunpack.c.l.b16 %v201
    %v557 = vunpack.c.h.b16 %v201
    %v558 = vunpack.c.l.b16 %v202
    %v559 = vunpack.c.h.b16 %v202
    %v560 = vunpack.c.l.b16 %v203
    %v561 = vunpack.c.h.b16 %v203
    %v562 = vunpack.c.l.b16 %v204
    %v563 = vunpack.c.h.b16 %v204
    %v564 = vunpack.c.l.b16 %v205
    %v565 = vunpack.c.h.b16 %v205
    %v566 = vunpack.c.l.b16 %v206
    %v567 = vunpack.c.h.b16 %v206
    %v568 = vunpack.c.l.b16 %v207
    %v569 = vunpack.c.h.b16 %v207
    %v570 = vunpack.c.l.b16 %v208
    %v571 = vunpack.c.h.b16 %v208
    %v572 = vunpack.c.l.b16 %v209
    %v573 = vunpack.c.h.b16 %v209
    %v574 = vunpack.c.l.b16 %v210
    %v575 = vunpack.c.h.b16 %v210
    %v576 = vunpack.c.l.b16 %v211
    %v577 = vunpack.c.h.b16 %v211
    %v578 = vunpack.c.l.b16 %v212
    %v579 = vunpack.c.h.b16 %v212
    %v580 = vunpack.c.l.b16 %v213
    %v581 = vunpack.c.h.b16 %v213
    %v582 = vunpack.c.l.b16 %v214
    %v583 = vunpack.c.h.b16 %v214
    %v584 = vunpack.c.l.b16 %v215
    %v585 = vunpack.c.h.b16 %v215
    %v586 = vunpack.c.l.b16 %v216
    %v587 = vunpack.c.h.b16 %v216
    %v588 = vunpack.c.l.b16 %v217
    %v589 = vunpack.c.h.b16 %v217
    %v590 = vunpack.c.l.b16 %v218
    %v591 = vunpack.c.h.b16 %v218
    %v592 = vunpack.c.l.b16 %v219
    %v593 = vunpack.c.h.b16 %v219
    %v594 = vunpack.c.l.b16 %v220
    %v595 = vunpack.c.h.b16 %v220
    %v596 = vunpack.c.l.b16 %v221
    %v597 = vunpack.c.h.b16 %v221
    %v598 = vunpack.c.l.b16 %v222
    %v599 = vunpack.c.h.b16 %v222
    %v600 = vunpack.c.l.b16 %v223
    %v601 = vunpack.c.h.b16 %v223
    %v602 = vunpack.c.l.b16 %v224
    %v603 = vunpack.c.h.b16 %v224
    %v604 = vunpack.c.l.b16 %v225
    %v605 = vunpack.c.h.b16 %v225
    %v606 = vunpack.c.l.b16 %v226
    %v607 = vunpack.c.h.b16 %v226
    %v608 = vunpack.c.l.b16 %v227
    %v609 = vunpack.c.h.b16 %v227
    %v610 = vunpack.c.l.b16 %v228
    %v611 = vunpack.c.h.b16 %v228
    %v612 = vunpack.c.l.b16 %v229
    %v613 = vunpack.c.h.b16 %v229
    %v614 = vunpack.c.l.b16 %v230
    %v615 = vunpack.c.h.b16 %v230
    %v616 = vunpack.c.l.b16 %v231
    %v617 = vunpack.c.h.b16 %v231
    %v618 = vunpack.c.l.b16 %v232
    %v619 = vunpack.c.h.b16 %v232
    %v620 = vunpack.c.l.b16 %v233
    %v621 = vunpack.c.h.b16 %v233
    %v622 = vunpack.c.l.b16 %v234
    %v623 = vunpack.c.h.b16 %v234
    %v624 = vunpack.c.l.b16 %v235
    %v625 = vunpack.c.h.b16 %v235
    %v626 = vunpack.c.l.b16 %v236
    %v627 = vunpack.c.h.b16 %v236
    %v628 = vunpack.c.l.b16 %v237
    %v629 = vunpack.c.h.b16 %v237
    %v630 = vunpack.c.l.b16 %v238
    %v631 = vunpack.c.h.b16 %v238
    %v632 = vunpack.c.l.b16 %v239
    %v633 = vunpack.c.h.b16 %v239
    %v634 = vunpack.c.l.b16 %v240
    %v635 = vunpack.c.h.b16 %v240
    %v636 = vunpack.c.l.b16 %v241
    %v637 = vunpack.c.h.b16 %v241
    %v638 = vunpack.c.l.b16 %v242
    %v639 = vunpack.c.h.b16 %v242
    %v640 = vunpack.c.l.b16 %v243
    %v641 = vunpack.c.h.b16 %v243
    %v642 = vunpack.c.l.b16 %v244
    %v643 = vunpack.c.h.b16 %v244
    %v644 = vunpack.c.l.b16 %v245
    %v645 = vunpack.c.h.b16 %v245
    %v646 = vunpack.c.l.b16 %v246
    %v647 = vunpack.c.h.b16 %v246
    %v648 = vunpack.c.l.b16 %v247
    %v649 = vunpack.c.h.b16 %v247
    %v650 = vunpack.c.l.b16 %v248
    %v651 = vunpack.c.h.b16 %v248
    %v652 = vunpack.c.l.b16 %v249
    %v653 = vunpack.c.h.b16 %v249
    %v654 = vunpack.c.l.b16 %v250
    %v655 = vunpack.c.h.b16 %v250
    %v656 = vunpack.c.l.b16 %v251
    %v657 = vunpack.c.h.b16 %v251
    %v658 = vunpack.c.l.b16 %v252
    %v659 = vunpack.c.h.b16 %v252
    %v660 = vunpack.c.l.b16 %v253
    %v661 = vunpack.c.h.b16 %v253
    %v662 = vunpack.c.l.b16 %v254
    %v663 = vunpack.c.h.b16 %v254
    %v664 = vunpack.c.l.b16 %v255
    %v665 = vunpack.c.h.b16 %v255
    %v666 = vunpack.c.l.b16 %v256
    %v667 = vunpack.c.h.b16 %v256
    %v668 = vunpack.c.l.b16 %v257
    %v669 = vunpack.c.h.b16 %v257
    %v670 = vunpack.c.l.b16 %v258
    %v671 = vunpack.c.h.b16 %v258
    %v672 = vunpack.c.l.b16 %v259
    %v673 = vunpack.c.h.b16 %v259
    %v674 = vunpack.c.l.b16 %v260
    %v675 = vunpack.c.h.b16 %v260
    %v676 = vunpack.c.l.b16 %v261
    %v677 = vunpack.c.h.b16 %v261
    %v678 = vunpack.c.l.b16 %v262
    %v679 = vunpack.c.h.b16 %v262
    %v680 = vunpack.c.l.b16 %v263
    %v681 = vunpack.c.h.b16 %v263
    %v682 = vunpack.c.l.b16 %v264
    %v683 = vunpack.c.h.b16 %v264
    %v684 = vunpack.c.l.b16 %v265
    %v685 = vunpack.c.h.b16 %v265
    %v686 = vunpack.c.l.b16 %v266
    %v687 = vunpack.c.h.b16 %v266
    %v688 = vunpack.c.l.b16 %v267
    %v689 = vunpack.c.h.b16 %v267
    %v690 = vunpack.c.l.b16 %v268
    %v691 = vunpack.c.h.b16 %v268
    %v692 = vunpack.c.l.b16 %v269
    %v693 = vunpack.c.h.b16 %v269
    %v694 = vunpack.c.l.b16 %v270
    %v695 = vunpack.c.h.b16 %v270
    %v696 = vunpack.c.l.b16 %v271
    %v697 = vunpack.c.h.b16 %v271
    %v698 = vunpack.c.l.b16 %v272
    %v699 = vunpack.c.h.b16 %v272
    %v700 = vunpack.c.l.b16 %v273
    %v701 = vunpack.c.h.b16 %v273
    %v702 = vunpack.c.l.b16 %v274
    %v703 = vunpack.c.h.b16 %v274
    %v704 = vunpack.c.l.b16 %v275
    %v705 = vunpack.c.h.b16 %v275
    %v706 = vunpack.c.l.b16 %v276
    %v707 = vunpack.c.h.b16 %v276
    %v708 = vunpack.c.l.b16 %v277
    %v709 = vunpack.c.h.b16 %v277
    %v710 = vunpack.c.l.b16 %v278
    %v711 = vunpack.c.h.b16 %v278
    %v712 = vunpack.c.l.b16 %v279
    %v713 = vunpack.c.h.b16 %v279
    %v714 = vunpack.c.l.b16 %v280
    %v715 = vunpack.c.h.b16 %v280
    %v716 = vunpack.c.l.b16 %v281
    %v717 = vunpack.c.h.b16 %v281
    %v718 = vunpack.c.l.b16 %v282
    %v719 = vunpack.c.h.b16 %v282
    %v720 = vunpack.c.l.b16 %v283
    %v721 = vunpack.c.h.b16 %v283
    %v722 = vunpack.c.l.b16 %v284
    %v723 = vunpack.c.h.b16 %v284
    %v724 = vunpack.c.l.b16 %v285
    %v725 = vunpack.c.h.b16 %v285
    %v726 = vunpack.c.l.b16 %v286
    %v727 = vunpack.c.h.b16 %v286
    %v728 = vunpack.c.l.b16 %v287
    %v729 = vunpack.c.h.b16 %v287
    %v730 = vunpack.c.l.b16 %v288
    %v731 = vunpack.c.h.b16 %v288
    %v732 = vunpack.c.l.b16 %v289
    %v733 = vunpack.c.h.b16 %v289
    %v734 = vunpack.c.l.b16 %v290
    %v735 = vunpack.c.h.b16 %v290
    %v736 = vunpack.c.l.b16 %v291
    %v737 = vunpack.c.h.b16 %v291
    %v738 = vunpack.c.l.b16 %v292
    %v739 = vunpack.c.h.b16 %v292
    %v740 = vunpack.c.l.b16 %v293
    %v741 = vunpack.c.h.b16 %v293
    %v742 = vunpack.c.l.b16 %v294
    %v743 = vunpack.c.h.b16 %v294
    %v744 = vunpack.c.l.b16 %v295
    %v745 = vunpack.c.h.b16 %v295
    %v746 = vunpack.c.l.b16 %v296
    %v747 = vunpack.c.h.b16 %v296
    %v748 = vunpack.c.l.b16 %v297
    %v749 = vunpack.c.h.b16 %v297
    %v750 = vunpack.c.l.b16 %v298
    %v751 = vunpack.c.h.b16 %v298
    %v752 = vunpack.c.l.b16 %v299
    %v753 = vunpack.c.h.b16 %v299
    %v754 = vunpack.c.l.b16 %v300
    %v755 = vunpack.c.h.b16 %v300
    %v756 = vunpack.c.l.b16 %v301
    %v757 = vunpack.c.h.b16 %v301
    %v758 = vunpack.c.l.b16 %v302
    %v759 = vunpack.c.h.b16 %v302
    %v760 = vunpack.c.l.b16 %v303
    %v761 = vunpack.c.h.b16 %v303
    %v762 = vunpack.c.l.b16 %v304
    %v763 = vunpack.c.h.b16 %v304
    %v764 = vunpack.c.l.b16 %v305
    %v765 = vunpack.c.h.b16 %v305
    %v766 = vunpack.c.l.b16 %v306
    %v767 = vunpack.c.h.b16 %v306
    %v768 = vunpack.c.l.b16 %v307
    %v769 = vunpack.c.h.b16 %v307
    %v770 = vunpack.c.l.b16 %v308
    %v771 = vunpack.c.h.b16 %v308
    %v772 = vunpack.c.l.b16 %v309
    %v773 = vunpack.c.h.b16 %v309
    %v774 = vunpack.c.l.b16 %v310
    %v775 = vunpack.c.h.b16 %v310
    %v776 = vunpack.c.l.b16 %v311
    %v777 = vunpack.c.h.b16 %v311
    %v778 = vunpack.c.l.b16 %v312
    %v779 = vunpack.c.h.b16 %v312
    %v780 = vunpack.c.l.b16 %v313
    %v781 = vunpack.c.h.b16 %v313
    %v782 = vunpack.c.l.b16 %v314
    %v783 = vunpack.c.h.b16 %v314
    %v784 = vunpack.c.l.b16 %v315
    %v785 = vunpack.c.h.b16 %v315
    %v786 = vunpack.c.l.b16 %v316
    %v787 = vunpack.c.h.b16 %v316
    %v788 = vunpack.c.l.b16 %v317
    %v789 = vunpack.c.h.b16 %v317
    %v790 = vunpack.c.l.b16 %v318
    %v791 = vunpack.c.h.b16 %v318
    %v792 = vunpack.c.l.b16 %v319
    %v793 = vunpack.c.h.b16 %v319
    %v794 = vunpack.c.l.b16 %v320
    %v795 = vunpack.c.h.b16 %v320
    %v796 = vunpack.c.l.b16 %v321
    %v797 = vunpack.c.h.b16 %v321
    %v798 = vunpack.c.l.b16 %v322
    %v799 = vunpack.c.h.b16 %v322
    %v800 = vunpack.c.l.b16 %v323
    %v801 = vunpack.c.h.b16 %v323
    %v802 = vunpack.c.l.b16 %v324
    %v803 = vunpack.c.h.b16 %v324
    %v804 = vunpack.c.l.b16 %v325
    %v805 = vunpack.c.h.b16 %v325
    %v806 = vunpack.c.l.b16 %v326
    %v807 = vunpack.c.h.b16 %v326
    %v808 = vunpack.c.l.b16 %v327
    %v809 = vunpack.c.h.b16 %v327
    %v810 = vunpack.c.l.b16 %v328
    %v811 = vunpack.c.h.b16 %v328
    %v812 = vunpack.c.l.b16 %v329
    %v813 = vunpack.c.h.b16 %v329
    %v814 = vunpack.c.l.b16 %v330
    %v815 = vunpack.c.h.b16 %v330
    %v816 = vunpack.c.l.b16 %v331
    %v817 = vunpack.c.h.b16 %v331
    %v818 = vunpack.c.l.b16 %v332
    %v819 = vunpack.c.h.b16 %v332
    %v820 = vunpack.c.l.b16 %v333
    %v821 = vunpack.c.h.b16 %v333
    %v822 = vunpack.c.l.b16 %v334
    %v823 = vunpack.c.h.b16 %v334
    %v824 = vunpack.c.l.b16 %v335
    %v825 = vunpack.c.h.b16 %v335
    %v826 = vunpack.c.l.b16 %v336
    %v827 = vunpack.c.h.b16 %v336
    %v828 = vunpack.c.l.b16 %v337
    %v829 = vunpack.c.h.b16 %v337
    %v830 = vunpack.c.l.b16 %v338
    %v831 = vunpack.c.h.b16 %v338
    %v832 = vunpack.c.l.b16 %v339
    %v833 = vunpack.c.h.b16 %v339
    %v834 = vunpack.c.l.b16 %v340
    %v835 = vunpack.c.h.b16 %v340
    %v836 = vunpack.c.l.b16 %v341
    %v837 = vunpack.c.h.b16 %v341
    %v838 = vunpack.c.l.b16 %v342
    %v839 = vunpack.c.h.b16 %v342
    %v840 = vunpack.c.l.b16 %v343
    %v841 = vunpack.c.h.b16 %v343
    %v842 = vpack.c.b16 %v520, %v518
    %v843 = vpack.c.b16 %v521, %v519
    %v844 = vpack.c.b16 %v524, %v522
    %v845 = vpack.c.b16 %v525, %v523
    %v846 = vpack.c.b16 %v528, %v526
    %v847 = vpack.c.b16 %v529, %v527
    %v848 = vpack.c.b16 %v532, %v530
    %v849 = vpack.c.b16 %v533, %v531
    %v850 = vpack.c.b16 %v536, %v534
    %v851 = vpack.c.b16 %v537, %v535
    %v852 = vpack.c.b16 %v540, %v538
    %v853 = vpack.c.b16 %v541, %v539
    %v854 = vpack.c.b16 %v544, %v542
    %v855 = vpack.c.b16 %v545, %v543
    %v856 = vpack.c.b16 %v548, %v546
    %v857 = vpack.c.b16 %v549, %v547
    %v858 = vpack.c.b16 %v552, %v550
    %v859 = vpack.c.b16 %v553, %v551
    %v860 = vpack.c.b16 %v556, %v554
    %v861 = vpack.c.b16 %v557, %v555
    %v862 = vpack.c.b16 %v560, %v558
    %v863 = vpack.c.b16 %v561, %v559
    %v864 = vpack.c.b16 %v564, %v562
    %v865 = vpack.c.b16 %v565, %v563
    %v866 = vpack.c.b16 %v568, %v566
    %v867 = vpack.c.b16 %v569, %v567
    %v868 = vpack.c.b16 %v572, %v570
    %v869 = vpack.c.b16 %v573, %v571
    %v870 = vpack.c.b16 %v576, %v574
    %v871 = vpack.c.b16 %v577, %v575
    %v872 = vpack.c.b16 %v580, %v578
    %v873 = vpack.c.b16 %v581, %v579
    %v874 = vpack.c.b16 %v584, %v582
    %v875 = vpack.c.b16 %v585, %v583
    %v876 = vpack.c.b16 %v588, %v586
    %v877 = vpack.c.b16 %v589, %v587
    %v878 = vpack.c.b16 %v592, %v590
    %v879 = vpack.c.b16 %v593, %v591
    %v880 = vpack.c.b16 %v596, %v594
    %v881 = vpack.c.b16 %v597, %v595
    %v882 = vpack.c.b16 %v600, %v598
    %v883 = vpack.c.b16 %v601, %v599
    %v884 = vpack.c.b16 %v604, %v602
    %v885 = vpack.c.b16 %v605, %v603
    %v886 = vpack.c.b16 %v608, %v606
    %v887 = vpack.c.b16 %v609, %v607
    %v888 = vpack.c.b16 %v612, %v610
    %v889 = vpack.c.b16 %v613, %v611
    %v890 = vpack.c.b16 %v616, %v614
    %v891 = vpack.c.b16 %v617, %v615
    %v892 = vpack.c.b16 %v620, %v618
    %v893 = vpack.c.b16 %v621, %v619
    %v894 = vpack.c.b16 %v624, %v622
    %v895 = vpack.c.b16 %v625, %v623
    %v896 = vpack.c.b16 %v628, %v626
    %v897 = vpack.c.b16 %v629, %v627
    %v898 = vpack.c.b16 %v632, %v630
    %v899 = vpack.c.b16 %v633, %v631
    %v900 = vpack.c.b16 %v636, %v634
    %v901 = vpack.c.b16 %v637, %v635
    %v902 = vpack.c.b16 %v640, %v638
    %v903 = vpack.c.b16 %v641, %v639
    %v904 = vpack.c.b16 %v644, %v642
    %v905 = vpack.c.b16 %v645, %v643
    %v906 = vpack.c.b16 %v648, %v646
    %v907 = vpack.c.b16 %v649, %v647
    %v908 = vpack.c.b16 %v652, %v650
    %v909 = vpack.c.b16 %v653, %v651
    %v910 = vpack.c.b16 %v656, %v654
    %v911 = vpack.c.b16 %v657, %v655
    %v912 = vpack.c.b16 %v660, %v658
    %v913 = vpack.c.b16 %v661, %v659
    %v914 = vpack.c.b16 %v664, %v662
    %v915 = vpack.c.b16 %v665, %v663
    %v916 = vpack.c.b16 %v668, %v666
    %v917 = vpack.c.b16 %v669, %v667
    %v918 = vpack.c.b16 %v672, %v670
    %v919 = vpack.c.b16 %v673, %v671
    %v920 = vpack.c.b16 %v676, %v674
    %v921 = vpack.c.b16 %v677, %v675
    %v922 = vpack.c.b16 %v680, %v678
    %v923 = vpack.c.b16 %v681, %v679
    %v924 = vpack.c.b16 %v684, %v682
    %v925 = vpack.c.b16 %v685, %v683
    %v926 = vpack.c.b16 %v688, %v686
    %v927 = vpack.c.b16 %v689, %v687
    %v928 = vpack.c.b16 %v692, %v690
    %v929 = vpack.c.b16 %v693, %v691
    %v930 = vpack.c.b16 %v696, %v694
    %v931 = vpack.c.b16 %v697, %v695
    %v932 = vpack.c.b16 %v700, %v698
    %v933 = vpack.c.b16 %v701, %v699
    %v934 = vpack.c.b16 %v704, %v702
    %v935 = vpack.c.b16 %v705, %v703
    %v936 = vpack.c.b16 %v708, %v706
    %v937 = vpack.c.b16 %v709, %v707
    %v938 = vpack.c.b16 %v712, %v710
    %v939 = vpack.c.b16 %v713, %v711
    %v940 = vpack.c.b16 %v716, %v714
    %v941 = vpack.c.b16 %v717, %v715
    %v942 = vpack.c.b16 %v720, %v718
    %v943 = vpack.c.b16 %v721, %v719
    %v944 = vpack.c.b16 %v724, %v722
    %v945 = vpack.c.b16 %v725, %v723
    %v946 = vpack.c.b16 %v728, %v726
    %v947 = vpack.c.b16 %v729, %v727
    %v948 = vpack.c.b16 %v732, %v730
    %v949 = vpack.c.b16 %v733, %v731
    %v950 = vpack.c.b16 %v736, %v734
    %v951 = vpack.c.b16 %v737, %v735
    %v952 = vpack.c.b16 %v740, %v738
    %v953 = vpack.c.b16 %v741, %v739
    %v954 = vpack.c.b16 %v744, %v742
    %v955 = vpack.c.b16 %v745, %v743
    %v956 = vpack.c.b16 %v748, %v746
    %v957 = vpack.c.b16 %v749, %v747
    %v958 = vpack.c.b16 %v752, %v750
    %v959 = vpack.c.b16 %v753, %v751
    %v960 = vpack.c.b16 %v756, %v754
    %v961 = vpack.c.b16 %v757, %v755
    %v962 = vpack.c.b16 %v760, %v758
    %v963 = vpack.c.b16 %v761, %v759
    %v964 = vpack.c.b16 %v764, %v762
    %v965 = vpack.c.b16 %v765, %v763
    %v966 = vpack.c.b16 %v768, %v766
    %v967 = vpack.c.b16 %v769, %v767
    %v968 = vpack.c.b16 %v772, %v770
    %v969 = vpack.c.b16 %v773, %v771
    %v970 = vpack.c.b16 %v776, %v774
    %v971 = vpack.c.b16 %v777, %v775
    %v972 = vpack.c.b16 %v780, %v778
    %v973 = vpack.c.b16 %v781, %v779
    %v974 = vpack.c.b16 %v784, %v782
    %v975 = vpack.c.b16 %v785, %v783
    %v976 = vpack.c.b16 %v788, %v786
    %v977 = vpack.c.b16 %v789, %v787
    %v978 = vpack.c.b16 %v792, %v790
    %v979 = vpack.c.b16 %v793, %v791
    %v980 = vpack.c.b16 %v796, %v794
    %v981 = vpack.c.b16 %v797, %v795
    %v982 = vpack.c.b16 %v800, %v798
    %v983 = vpack.c.b16 %v801, %v799
    %v984 = vpack.c.b16 %v804, %v802
    %v985 = vpack.c.b16 %v805, %v803
    %v986 = vpack.c.b16 %v808, %v806
    %v987 = vpack.c.b16 %v809, %v807
    %v988 = vpack.c.b16 %v812, %v810
    %v989 = vpack.c.b16 %v813, %v811
    %v990 = vpack.c.b16 %v816, %v814
    %v991 = vpack.c.b16 %v817, %v815
    %v992 = vpack.c.b16 %v820, %v818
    %v993 = vpack.c.b16 %v821, %v819
    %v994 = vpack.c.b16 %v824, %v822
    %v995 = vpack.c.b16 %v825, %v823
    %v996 = vpack.c.b16 %v828, %v826
    %v997 = vpack.c.b16 %v829, %v827
    %v998 = vpack.c.b16 %v832, %v830
    %v999 = vpack.c.b16 %v833, %v831
    %v1000 = vpack.c.b16 %v836, %v834
    %v1001 = vpack.c.b16 %v837, %v835
    %v1002 = vpack.c.b16 %v840, %v838
    %v1003 = vpack.c.b16 %v841, %v839
    %vm1166 = vcmask 130048
    %v1168 = vsel %vm1166, %v159, 0
    %v1171 = vsel %vm1166, %v170, 0
    %v1174 = vsel %vm1166, %v181, 0
    %1176 = vmatprep.subr.bf16.mxu0 %v857
    %1177 = vmatpush1.bf16.msra.mxu0 %v856
    %1178 = vmatprep.subr.bf16.mxu0 %v855
    %1179 = vmatpush1.bf16.msra.mxu0 %v854
    %1180 = vmatprep.subr.bf16.mxu0 %v853
    %1181 = vmatpush1.bf16.msra.mxu0 %v852
    %1182 = vmatprep.subr.bf16.mxu0 %v851
    %1183 = vmatpush1.bf16.msra.mxu0 %v850
    %1184 = vmatprep.subr.bf16.mxu0 %v849
    %1185 = vmatpush1.bf16.msra.mxu0 %v848
    %1186 = vmatprep.subr.bf16.mxu0 %v847
    %1187 = vmatpush1.bf16.msra.mxu0 %v846
    %1188 = vmatprep.subr.bf16.mxu0 %v845
    %1189 = vmatpush1.bf16.msra.mxu0 %v844
    %1190 = vmatprep.subr.bf16.mxu0 %v843
    %1191 = vmatpush1.bf16.msra.mxu0 %v842
    %1192 = vmatprep.subr.bf16.mxu0 %v873
    %1193 = vmatpush2.bf16.msra.mxu0 %v872
    %1194 = vmatprep.subr.bf16.mxu0 %v871
    %1195 = vmatpush2.bf16.msra.mxu0 %v870
    %1196 = vmatprep.subr.bf16.mxu0 %v869
    %1197 = vmatpush2.bf16.msra.mxu0 %v868
    %1198 = vmatprep.subr.bf16.mxu0 %v867
    %1199 = vmatpush2.bf16.msra.mxu0 %v866
    %1200 = vmatprep.subr.bf16.mxu0 %v865
    %1201 = vmatpush2.bf16.msra.mxu0 %v864
    %1202 = vmatprep.subr.bf16.mxu0 %v863
    %1203 = vmatpush2.bf16.msra.mxu0 %v862
    %1204 = vmatprep.subr.bf16.mxu0 %v861
    %1205 = vmatpush2.bf16.msra.mxu0 %v860
    %1206 = vmatprep.subr.bf16.mxu0 %v859
    %1207 = vmatpush2.bf16.msra.mxu0 %v858
    %1208 = vmatprep.mubr.bf16.mxu0 %v150
    %1209 = vmatmul.mubr.bf16.gmra.mxu0 %v149
    %v1210 = vpop.f32.mrf.mxu0
    %v1211 = vadd.f32 %v349, %v1210
    %v1212 = vpop.f32.mrf.mxu0
    %v1213 = vadd.f32 %v353, %v1212
    %v1214 = vpop.f32.mrf.mxu0
    %v1215 = vadd.f32 %v349, %v1214
    %v1216 = vpop.f32.mrf.mxu0
    %v1217 = vadd.f32 %v353, %v1216
    %1218 = vmatprep.mubr.bf16.mxu0 %v161
    %1219 = vmatmul.mubr.bf16.gmra.mxu0 %v160
    %v1220 = vpop.f32.mrf.mxu0
    %v1221 = vadd.f32 %v349, %v1220
    %v1222 = vpop.f32.mrf.mxu0
    %v1223 = vadd.f32 %v353, %v1222
    %v1224 = vpop.f32.mrf.mxu0
    %v1225 = vadd.f32 %v349, %v1224
    %v1226 = vpop.f32.mrf.mxu0
    %v1227 = vadd.f32 %v353, %v1226
    %1228 = vmatprep.mubr.bf16.mxu0 %v172
    %1229 = vmatmul.mubr.bf16.gmra.mxu0 %v171
    %v1230 = vpop.f32.mrf.mxu0
    %v1231 = vadd.f32 %v349, %v1230
    %v1232 = vpop.f32.mrf.mxu0
    %v1233 = vadd.f32 %v353, %v1232
    %v1234 = vpop.f32.mrf.mxu0
    %v1235 = vadd.f32 %v349, %v1234
    %v1236 = vpop.f32.mrf.mxu0
    %v1237 = vadd.f32 %v353, %v1236
    %1238 = vdwg.mxu0
    %1239 = vmatprep.subr.bf16.mxu0 %v889
    %1240 = vmatpush1.bf16.msra.mxu0 %v888
    %1241 = vmatprep.subr.bf16.mxu0 %v887
    %1242 = vmatpush1.bf16.msra.mxu0 %v886
    %1243 = vmatprep.subr.bf16.mxu0 %v885
    %1244 = vmatpush1.bf16.msra.mxu0 %v884
    %1245 = vmatprep.subr.bf16.mxu0 %v883
    %1246 = vmatpush1.bf16.msra.mxu0 %v882
    %1247 = vmatprep.subr.bf16.mxu0 %v881
    %1248 = vmatpush1.bf16.msra.mxu0 %v880
    %1249 = vmatprep.subr.bf16.mxu0 %v879
    %1250 = vmatpush1.bf16.msra.mxu0 %v878
    %1251 = vmatprep.subr.bf16.mxu0 %v877
    %1252 = vmatpush1.bf16.msra.mxu0 %v876
    %1253 = vmatprep.subr.bf16.mxu0 %v875
    %1254 = vmatpush1.bf16.msra.mxu0 %v874
    %1255 = vmatprep.subr.bf16.mxu0 %v905
    %1256 = vmatpush2.bf16.msra.mxu0 %v904
    %1257 = vmatprep.subr.bf16.mxu0 %v903
    %1258 = vmatpush2.bf16.msra.mxu0 %v902
    %1259 = vmatprep.subr.bf16.mxu0 %v901
    %1260 = vmatpush2.bf16.msra.mxu0 %v900
    %1261 = vmatprep.subr.bf16.mxu0 %v899
    %1262 = vmatpush2.bf16.msra.mxu0 %v898
    %1263 = vmatprep.subr.bf16.mxu0 %v897
    %1264 = vmatpush2.bf16.msra.mxu0 %v896
    %1265 = vmatprep.subr.bf16.mxu0 %v895
    %1266 = vmatpush2.bf16.msra.mxu0 %v894
    %1267 = vmatprep.subr.bf16.mxu0 %v893
    %1268 = vmatpush2.bf16.msra.mxu0 %v892
    %1269 = vmatprep.subr.bf16.mxu0 %v891
    %1270 = vmatpush2.bf16.msra.mxu0 %v890
    %1271 = vmatprep.mubr.bf16.mxu0 %v152
    %1272 = vmatmul.mubr.bf16.gmra.mxu0 %v151
    %v1273 = vpop.f32.mrf.mxu0
    %v1274 = vadd.f32 %v1211, %v1273
    %v1275 = vpop.f32.mrf.mxu0
    %v1276 = vadd.f32 %v1213, %v1275
    %v1277 = vpop.f32.mrf.mxu0
    %v1278 = vadd.f32 %v1215, %v1277
    %v1279 = vpop.f32.mrf.mxu0
    %v1280 = vadd.f32 %v1217, %v1279
    %1281 = vmatprep.mubr.bf16.mxu0 %v163
    %1282 = vmatmul.mubr.bf16.gmra.mxu0 %v162
    %v1283 = vpop.f32.mrf.mxu0
    %v1284 = vadd.f32 %v1221, %v1283
    %v1285 = vpop.f32.mrf.mxu0
    %v1286 = vadd.f32 %v1223, %v1285
    %v1287 = vpop.f32.mrf.mxu0
    %v1288 = vadd.f32 %v1225, %v1287
    %v1289 = vpop.f32.mrf.mxu0
    %v1290 = vadd.f32 %v1227, %v1289
    %1291 = vmatprep.mubr.bf16.mxu0 %v174
    %1292 = vmatmul.mubr.bf16.gmra.mxu0 %v173
    %v1293 = vpop.f32.mrf.mxu0
    %v1294 = vadd.f32 %v1231, %v1293
    %v1295 = vpop.f32.mrf.mxu0
    %v1296 = vadd.f32 %v1233, %v1295
    %v1297 = vpop.f32.mrf.mxu0
    %v1298 = vadd.f32 %v1235, %v1297
    %v1299 = vpop.f32.mrf.mxu0
    %v1300 = vadd.f32 %v1237, %v1299
    %1301 = vdwg.mxu0
    %1302 = vmatprep.subr.bf16.mxu0 %v921
    %1303 = vmatpush1.bf16.msra.mxu0 %v920
    %1304 = vmatprep.subr.bf16.mxu0 %v919
    %1305 = vmatpush1.bf16.msra.mxu0 %v918
    %1306 = vmatprep.subr.bf16.mxu0 %v917
    %1307 = vmatpush1.bf16.msra.mxu0 %v916
    %1308 = vmatprep.subr.bf16.mxu0 %v915
    %1309 = vmatpush1.bf16.msra.mxu0 %v914
    %1310 = vmatprep.subr.bf16.mxu0 %v913
    %1311 = vmatpush1.bf16.msra.mxu0 %v912
    %1312 = vmatprep.subr.bf16.mxu0 %v911
    %1313 = vmatpush1.bf16.msra.mxu0 %v910
    %1314 = vmatprep.subr.bf16.mxu0 %v909
    %1315 = vmatpush1.bf16.msra.mxu0 %v908
    %1316 = vmatprep.subr.bf16.mxu0 %v907
    %1317 = vmatpush1.bf16.msra.mxu0 %v906
    %1318 = vmatprep.subr.bf16.mxu0 %v937
    %1319 = vmatpush2.bf16.msra.mxu0 %v936
    %1320 = vmatprep.subr.bf16.mxu0 %v935
    %1321 = vmatpush2.bf16.msra.mxu0 %v934
    %1322 = vmatprep.subr.bf16.mxu0 %v933
    %1323 = vmatpush2.bf16.msra.mxu0 %v932
    %1324 = vmatprep.subr.bf16.mxu0 %v931
    %1325 = vmatpush2.bf16.msra.mxu0 %v930
    %1326 = vmatprep.subr.bf16.mxu0 %v929
    %1327 = vmatpush2.bf16.msra.mxu0 %v928
    %1328 = vmatprep.subr.bf16.mxu0 %v927
    %1329 = vmatpush2.bf16.msra.mxu0 %v926
    %1330 = vmatprep.subr.bf16.mxu0 %v925
    %1331 = vmatpush2.bf16.msra.mxu0 %v924
    %1332 = vmatprep.subr.bf16.mxu0 %v923
    %1333 = vmatpush2.bf16.msra.mxu0 %v922
    %1334 = vmatprep.mubr.bf16.mxu0 %v154
    %1335 = vmatmul.mubr.bf16.gmra.mxu0 %v153
    %v1336 = vpop.f32.mrf.mxu0
    %v1337 = vadd.f32 %v1274, %v1336
    %v1338 = vpop.f32.mrf.mxu0
    %v1339 = vadd.f32 %v1276, %v1338
    %v1340 = vpop.f32.mrf.mxu0
    %v1341 = vadd.f32 %v1278, %v1340
    %v1342 = vpop.f32.mrf.mxu0
    %v1343 = vadd.f32 %v1280, %v1342
    %1344 = vmatprep.mubr.bf16.mxu0 %v165
    %1345 = vmatmul.mubr.bf16.gmra.mxu0 %v164
    %v1346 = vpop.f32.mrf.mxu0
    %v1347 = vadd.f32 %v1284, %v1346
    %v1348 = vpop.f32.mrf.mxu0
    %v1349 = vadd.f32 %v1286, %v1348
    %v1350 = vpop.f32.mrf.mxu0
    %v1351 = vadd.f32 %v1288, %v1350
    %v1352 = vpop.f32.mrf.mxu0
    %v1353 = vadd.f32 %v1290, %v1352
    %1354 = vmatprep.mubr.bf16.mxu0 %v176
    %1355 = vmatmul.mubr.bf16.gmra.mxu0 %v175
    %v1356 = vpop.f32.mrf.mxu0
    %v1357 = vadd.f32 %v1294, %v1356
    %v1358 = vpop.f32.mrf.mxu0
    %v1359 = vadd.f32 %v1296, %v1358
    %v1360 = vpop.f32.mrf.mxu0
    %v1361 = vadd.f32 %v1298, %v1360
    %v1362 = vpop.f32.mrf.mxu0
    %v1363 = vadd.f32 %v1300, %v1362
    %1364 = vdwg.mxu0
    %1365 = vmatprep.subr.bf16.mxu0 %v953
    %1366 = vmatpush1.bf16.msra.mxu0 %v952
    %1367 = vmatprep.subr.bf16.mxu0 %v951
    %1368 = vmatpush1.bf16.msra.mxu0 %v950
    %1369 = vmatprep.subr.bf16.mxu0 %v949
    %1370 = vmatpush1.bf16.msra.mxu0 %v948
    %1371 = vmatprep.subr.bf16.mxu0 %v947
    %1372 = vmatpush1.bf16.msra.mxu0 %v946
    %1373 = vmatprep.subr.bf16.mxu0 %v945
    %1374 = vmatpush1.bf16.msra.mxu0 %v944
    %1375 = vmatprep.subr.bf16.mxu0 %v943
    %1376 = vmatpush1.bf16.msra.mxu0 %v942
    %1377 = vmatprep.subr.bf16.mxu0 %v941
    %1378 = vmatpush1.bf16.msra.mxu0 %v940
    %1379 = vmatprep.subr.bf16.mxu0 %v939
    %1380 = vmatpush1.bf16.msra.mxu0 %v938
    %1381 = vmatprep.subr.bf16.mxu0 %v969
    %1382 = vmatpush2.bf16.msra.mxu0 %v968
    %1383 = vmatprep.subr.bf16.mxu0 %v967
    %1384 = vmatpush2.bf16.msra.mxu0 %v966
    %1385 = vmatprep.subr.bf16.mxu0 %v965
    %1386 = vmatpush2.bf16.msra.mxu0 %v964
    %1387 = vmatprep.subr.bf16.mxu0 %v963
    %1388 = vmatpush2.bf16.msra.mxu0 %v962
    %1389 = vmatprep.subr.bf16.mxu0 %v961
    %1390 = vmatpush2.bf16.msra.mxu0 %v960
    %1391 = vmatprep.subr.bf16.mxu0 %v959
    %1392 = vmatpush2.bf16.msra.mxu0 %v958
    %1393 = vmatprep.subr.bf16.mxu0 %v957
    %1394 = vmatpush2.bf16.msra.mxu0 %v956
    %1395 = vmatprep.subr.bf16.mxu0 %v955
    %1396 = vmatpush2.bf16.msra.mxu0 %v954
    %1397 = vmatprep.mubr.bf16.mxu0 %v156
    %1398 = vmatmul.mubr.bf16.gmra.mxu0 %v155
    %v1399 = vpop.f32.mrf.mxu0
    %v1400 = vadd.f32 %v1337, %v1399
    %v1401 = vpop.f32.mrf.mxu0
    %v1402 = vadd.f32 %v1339, %v1401
    %v1403 = vpop.f32.mrf.mxu0
    %v1404 = vadd.f32 %v1341, %v1403
    %v1405 = vpop.f32.mrf.mxu0
    %v1406 = vadd.f32 %v1343, %v1405
    %1407 = vmatprep.mubr.bf16.mxu0 %v167
    %1408 = vmatmul.mubr.bf16.gmra.mxu0 %v166
    %v1409 = vpop.f32.mrf.mxu0
    %v1410 = vadd.f32 %v1347, %v1409
    %v1411 = vpop.f32.mrf.mxu0
    %v1412 = vadd.f32 %v1349, %v1411
    %v1413 = vpop.f32.mrf.mxu0
    %v1414 = vadd.f32 %v1351, %v1413
    %v1415 = vpop.f32.mrf.mxu0
    %v1416 = vadd.f32 %v1353, %v1415
    %1417 = vmatprep.mubr.bf16.mxu0 %v178
    %1418 = vmatmul.mubr.bf16.gmra.mxu0 %v177
    %v1419 = vpop.f32.mrf.mxu0
    %v1420 = vadd.f32 %v1357, %v1419
    %v1421 = vpop.f32.mrf.mxu0
    %v1422 = vadd.f32 %v1359, %v1421
    %v1423 = vpop.f32.mrf.mxu0
    %v1424 = vadd.f32 %v1361, %v1423
    %v1425 = vpop.f32.mrf.mxu0
    %v1426 = vadd.f32 %v1363, %v1425
    %1427 = vdwg.mxu0
    %1428 = vmatprep.subr.bf16.mxu0 %v985
    %1429 = vmatpush1.bf16.msra.mxu0 %v984
    %1430 = vmatprep.subr.bf16.mxu0 %v983
    %1431 = vmatpush1.bf16.msra.mxu0 %v982
    %1432 = vmatprep.subr.bf16.mxu0 %v981
    %1433 = vmatpush1.bf16.msra.mxu0 %v980
    %1434 = vmatprep.subr.bf16.mxu0 %v979
    %1435 = vmatpush1.bf16.msra.mxu0 %v978
    %1436 = vmatprep.subr.bf16.mxu0 %v977
    %1437 = vmatpush1.bf16.msra.mxu0 %v976
    %1438 = vmatprep.subr.bf16.mxu0 %v975
    %1439 = vmatpush1.bf16.msra.mxu0 %v974
    %1440 = vmatprep.subr.bf16.mxu0 %v973
    %1441 = vmatpush1.bf16.msra.mxu0 %v972
    %1442 = vmatprep.subr.bf16.mxu0 %v971
    %1443 = vmatpush1.bf16.msra.mxu0 %v970
    %1444 = vmatprep.subr.bf16.mxu0 %v1001
    %1445 = vmatpush2.bf16.msra.mxu0 %v1000
    %1446 = vmatprep.subr.bf16.mxu0 %v999
    %1447 = vmatpush2.bf16.msra.mxu0 %v998
    %1448 = vmatprep.subr.bf16.mxu0 %v997
    %1449 = vmatpush2.bf16.msra.mxu0 %v996
    %1450 = vmatprep.subr.bf16.mxu0 %v995
    %1451 = vmatpush2.bf16.msra.mxu0 %v994
    %1452 = vmatprep.subr.bf16.mxu0 %v993
    %1453 = vmatpush2.bf16.msra.mxu0 %v992
    %1454 = vmatprep.subr.bf16.mxu0 %v991
    %1455 = vmatpush2.bf16.msra.mxu0 %v990
    %1456 = vmatprep.subr.bf16.mxu0 %v989
    %1457 = vmatpush2.bf16.msra.mxu0 %v988
    %1458 = vmatprep.subr.bf16.mxu0 %v987
    %1459 = vmatpush2.bf16.msra.mxu0 %v986
    %1460 = vmatprep.mubr.bf16.mxu0 %v158
    %1461 = vmatmul.mubr.bf16.gmra.mxu0 %v157
    %v1462 = vpop.f32.mrf.mxu0
    %v1463 = vadd.f32 %v1400, %v1462
    %v1464 = vpop.f32.mrf.mxu0
    %v1465 = vadd.f32 %v1402, %v1464
    %v1466 = vpop.f32.mrf.mxu0
    %v1467 = vadd.f32 %v1404, %v1466
    %v1468 = vpop.f32.mrf.mxu0
    %v1469 = vadd.f32 %v1406, %v1468
    %1470 = vmatprep.mubr.bf16.mxu0 %v169
    %1471 = vmatmul.mubr.bf16.gmra.mxu0 %v168
    %v1472 = vpop.f32.mrf.mxu0
    %v1473 = vadd.f32 %v1410, %v1472
    %v1474 = vpop.f32.mrf.mxu0
    %v1475 = vadd.f32 %v1412, %v1474
    %v1476 = vpop.f32.mrf.mxu0
    %v1477 = vadd.f32 %v1414, %v1476
    %v1478 = vpop.f32.mrf.mxu0
    %v1479 = vadd.f32 %v1416, %v1478
    %1480 = vmatprep.mubr.bf16.mxu0 %v180
    %1481 = vmatmul.mubr.bf16.gmra.mxu0 %v179
    %v1482 = vpop.f32.mrf.mxu0
    %v1483 = vadd.f32 %v1420, %v1482
    %v1484 = vpop.f32.mrf.mxu0
    %v1485 = vadd.f32 %v1422, %v1484
    %v1486 = vpop.f32.mrf.mxu0
    %v1487 = vadd.f32 %v1424, %v1486
    %v1488 = vpop.f32.mrf.mxu0
    %v1489 = vadd.f32 %v1426, %v1488
    %1490 = vdwg.mxu0
    %1491 = vmatprep.subr.bf16.mxu0 0
    %1492 = vmatpush1.bf16.msra.mxu0 0
    %1493 = vmatprep.subr.bf16.mxu0 0
    %1494 = vmatpush1.bf16.msra.mxu0 0
    %1495 = vmatprep.subr.bf16.mxu0 0
    %1496 = vmatpush1.bf16.msra.mxu0 0
    %1497 = vmatprep.subr.bf16.mxu0 0
    %1498 = vmatpush1.bf16.msra.mxu0 0
    %1499 = vmatprep.subr.bf16.mxu0 0
    %1500 = vmatpush1.bf16.msra.mxu0 0
    %1501 = vmatprep.subr.bf16.mxu0 0
    %1502 = vmatpush1.bf16.msra.mxu0 0
    %1503 = vmatprep.subr.bf16.mxu0 0
    %1504 = vmatpush1.bf16.msra.mxu0 0
    %1505 = vmatprep.subr.bf16.mxu0 %v1003
    %1506 = vmatpush1.bf16.msra.mxu0 %v1002
    %1507 = vmatprep.subr.bf16.mxu0 0
    %1508 = vmatpush2.bf16.msra.mxu0 0
    %1509 = vmatprep.subr.bf16.mxu0 0
    %1510 = vmatpush2.bf16.msra.mxu0 0
    %1511 = vmatprep.subr.bf16.mxu0 0
    %1512 = vmatpush2.bf16.msra.mxu0 0
    %1513 = vmatprep.subr.bf16.mxu0 0
    %1514 = vmatpush2.bf16.msra.mxu0 0
    %1515 = vmatprep.subr.bf16.mxu0 0
    %1516 = vmatpush2.bf16.msra.mxu0 0
    %1517 = vmatprep.subr.bf16.mxu0 0
    %1518 = vmatpush2.bf16.msra.mxu0 0
    %1519 = vmatprep.subr.bf16.mxu0 0
    %1520 = vmatpush2.bf16.msra.mxu0 0
    %1521 = vmatprep.subr.bf16.mxu0 0
    %1522 = vmatpush2.bf16.msra.mxu0 0
    %1523 = vmatprep.mubr.bf16.mxu0 0
    %1524 = vmatmul.mubr.bf16.gmra.mxu0 %v1168
    %v1525 = vpop.f32.mrf.mxu0
    %v1526 = vadd.f32 %v1463, %v1525
    %v1527 = vpop.f32.mrf.mxu0
    %v1528 = vadd.f32 %v1465, %v1527
    %v1529 = vpop.f32.mrf.mxu0
    %v1530 = vadd.f32 %v1467, %v1529
    %v1531 = vpop.f32.mrf.mxu0
    %v1532 = vadd.f32 %v1469, %v1531
    %1533 = vmatprep.mubr.bf16.mxu0 0
    %1534 = vmatmul.mubr.bf16.gmra.mxu0 %v1171
    %v1535 = vpop.f32.mrf.mxu0
    %v1536 = vadd.f32 %v1473, %v1535
    %v1537 = vpop.f32.mrf.mxu0
    %v1538 = vadd.f32 %v1475, %v1537
    %v1539 = vpop.f32.mrf.mxu0
    %v1540 = vadd.f32 %v1477, %v1539
    %v1541 = vpop.f32.mrf.mxu0
    %v1542 = vadd.f32 %v1479, %v1541
    %1543 = vmatprep.mubr.bf16.mxu0 0
    %1544 = vmatmul.mubr.bf16.gmra.mxu0 %v1174
    %v1545 = vpop.f32.mrf.mxu0
    %v1546 = vadd.f32 %v1483, %v1545
    %v1547 = vpop.f32.mrf.mxu0
    %v1548 = vadd.f32 %v1485, %v1547
    %v1549 = vpop.f32.mrf.mxu0
    %v1550 = vadd.f32 %v1487, %v1549
    %v1551 = vpop.f32.mrf.mxu0
    %v1552 = vadd.f32 %v1489, %v1551
    %1553 = vdwg.mxu0
    %v1554 = vmax.f32 %v1526, 0.0
    %v1555 = vmax.f32 %v1528, 0.0
    %v1556 = vmax.f32 %v1530, 0.0
    %v1557 = vmax.f32 %v1532, 0.0
    %v1558 = vmax.f32 %v1536, 0.0
    %v1559 = vmax.f32 %v1538, 0.0
    %v1560 = vmax.f32 %v1540, 0.0
    %v1561 = vmax.f32 %v1542, 0.0
    %v1562 = vmax.f32 %v1546, 0.0
    %v1563 = vmax.f32 %v1548, 0.0
    %v1564 = vmax.f32 %v1550, 0.0
    %v1565 = vmax.f32 %v1552, 0.0
    %v1566 = vpack.c.bf16 %v1556, %v1554
    %v1567 = vpack.c.bf16 %v1557, %v1555
    %v1568 = vpack.c.bf16 %v1560, %v1558
    %v1569 = vpack.c.bf16 %v1561, %v1559
    %v1570 = vpack.c.bf16 %v1564, %v1562
    %v1571 = vpack.c.bf16 %v1565, %v1563
    %v1572 = vld [vmem:[#allocation7] sm:$0xf]
    %v1573 = vld [vmem:[#allocation7 + $0x4] sm:$0xf]
    %v1574 = vld [vmem:[#allocation7 + $0x8] sm:$0xf]
    %v1575 = vld [vmem:[#allocation7 + $0xc] sm:$0xf]
    %v1576 = vld [vmem:[#allocation7 + $0x10] sm:$0xf]
    %v1577 = vld [vmem:[#allocation7 + $0x14] sm:$0xf]
    %v1578 = vld [vmem:[#allocation7 + $0x18] sm:$0xf]
    %v1579 = vld [vmem:[#allocation7 + $0x1c] sm:$0xf]
    %v1580 = vld [vmem:[#allocation7 + $0x20] sm:$0xf]
    %v1581 = vld [vmem:[#allocation7 + $0x24] sm:$0xf]
    %v1582 = vld [vmem:[#allocation7 + $0x28] sm:$0xf]
    %v1583 = vld [vmem:[#allocation7 + $0x2c] sm:$0xf]
    %v1584 = vld [vmem:[#allocation7 + $0x30] sm:$0xf]
    %v1585 = vld [vmem:[#allocation7 + $0x34] sm:$0xf]
    %v1586 = vld [vmem:[#allocation7 + $0x38] sm:$0xf]
    %v1587 = vld [vmem:[#allocation7 + $0x3c] sm:$0xf]
    %v1588 = vld [vmem:[#allocation7 + $0x40] sm:$0xf]
    %v1589 = vld [vmem:[#allocation7 + $0x44] sm:$0xf]
    %v1590 = vld [vmem:[#allocation7 + $0x48] sm:$0xf]
    %v1591 = vld [vmem:[#allocation7 + $0x4c] sm:$0xf]
    %v1592 = vld [vmem:[#allocation7 + $0x50] sm:$0xf]
    %v1593 = vld [vmem:[#allocation7 + $0x54] sm:$0xf]
    %v1594 = vld [vmem:[#allocation7 + $0x58] sm:$0xf]
    %v1595 = vld [vmem:[#allocation7 + $0x5c] sm:$0xf]
    %v1596 = vld [vmem:[#allocation7 + $0x60] sm:$0xf]
    %v1597 = vld [vmem:[#allocation7 + $0x64] sm:$0xf]
    %v1598 = vld [vmem:[#allocation7 + $0x68] sm:$0xf]
    %v1599 = vld [vmem:[#allocation7 + $0x6c] sm:$0xf]
    %v1600 = vld [vmem:[#allocation7 + $0x70] sm:$0xf]
    %v1601 = vld [vmem:[#allocation7 + $0x74] sm:$0xf]
    %v1602 = vld [vmem:[#allocation7 + $0x78] sm:$0xf]
    %v1603 = vld [vmem:[#allocation7 + $0x7c] sm:$0xf]
    %v1604 = vld [vmem:[%s4] sm:$0x1]
    %v1606 = vlaneseq
    %v1607 = vshrl.u32 %v1606, 7
    %v1608 = vsub.s32 0, %v1607
    %v1609 = vrot.slane %v1604, %v1608
    %v1643 = vunpack.c.l.b16 %v1572
    %v1644 = vunpack.c.l.b16 %v1573
    %v1645 = vunpack.c.l.b16 %v1574
    %v1646 = vunpack.c.l.b16 %v1575
    %v1647 = vunpack.c.l.b16 %v1576
    %v1648 = vunpack.c.l.b16 %v1577
    %v1649 = vunpack.c.l.b16 %v1578
    %v1650 = vunpack.c.l.b16 %v1579
    %v1651 = vunpack.c.l.b16 %v1580
    %v1652 = vunpack.c.l.b16 %v1581
    %v1653 = vunpack.c.l.b16 %v1582
    %v1654 = vunpack.c.l.b16 %v1583
    %v1655 = vunpack.c.l.b16 %v1584
    %v1656 = vunpack.c.l.b16 %v1585
    %v1657 = vunpack.c.l.b16 %v1586
    %v1658 = vunpack.c.l.b16 %v1587
    %v1659 = vunpack.c.l.b16 %v1588
    %v1660 = vunpack.c.l.b16 %v1589
    %v1661 = vunpack.c.l.b16 %v1590
    %v1662 = vunpack.c.l.b16 %v1591
    %v1663 = vunpack.c.l.b16 %v1592
    %v1664 = vunpack.c.l.b16 %v1593
    %v1665 = vunpack.c.l.b16 %v1594
    %v1666 = vunpack.c.l.b16 %v1595
    %v1667 = vunpack.c.l.b16 %v1596
    %v1668 = vunpack.c.l.b16 %v1597
    %v1669 = vunpack.c.l.b16 %v1598
    %v1670 = vunpack.c.l.b16 %v1599
    %v1671 = vunpack.c.l.b16 %v1600
    %v1672 = vunpack.c.l.b16 %v1601
    %v1673 = vunpack.c.l.b16 %v1602
    %v1674 = vunpack.c.l.b16 %v1603
    %v1675 = vpack.c.b16 %v1644, %v1643
    %v1676 = vpack.c.b16 %v1646, %v1645
    %v1677 = vpack.c.b16 %v1648, %v1647
    %v1678 = vpack.c.b16 %v1650, %v1649
    %v1679 = vpack.c.b16 %v1652, %v1651
    %v1680 = vpack.c.b16 %v1654, %v1653
    %v1681 = vpack.c.b16 %v1656, %v1655
    %v1682 = vpack.c.b16 %v1658, %v1657
    %v1683 = vpack.c.b16 %v1660, %v1659
    %v1684 = vpack.c.b16 %v1662, %v1661
    %v1685 = vpack.c.b16 %v1664, %v1663
    %v1686 = vpack.c.b16 %v1666, %v1665
    %v1687 = vpack.c.b16 %v1668, %v1667
    %v1688 = vpack.c.b16 %v1670, %v1669
    %v1689 = vpack.c.b16 %v1672, %v1671
    %v1690 = vpack.c.b16 %v1674, %v1673
    %1707 = vmatprep.subr.bf16.mxu0 0
    %1708 = vmatpush1.bf16.msra.mxu0 %v1682
    %1709 = vmatprep.subr.bf16.mxu0 0
    %1710 = vmatpush1.bf16.msra.mxu0 %v1681
    %1711 = vmatprep.subr.bf16.mxu0 0
    %1712 = vmatpush1.bf16.msra.mxu0 %v1680
    %1713 = vmatprep.subr.bf16.mxu0 0
    %1714 = vmatpush1.bf16.msra.mxu0 %v1679
    %1715 = vmatprep.subr.bf16.mxu0 0
    %1716 = vmatpush1.bf16.msra.mxu0 %v1678
    %1717 = vmatprep.subr.bf16.mxu0 0
    %1718 = vmatpush1.bf16.msra.mxu0 %v1677
    %1719 = vmatprep.subr.bf16.mxu0 0
    %1720 = vmatpush1.bf16.msra.mxu0 %v1676
    %1721 = vmatprep.subr.bf16.mxu0 0
    %1722 = vmatpush1.bf16.msra.mxu0 %v1675
    %1723 = vmatprep.subr.bf16.mxu0 0
    %1724 = vmatpush2.bf16.msra.mxu0 %v1690
    %1725 = vmatprep.subr.bf16.mxu0 0
    %1726 = vmatpush2.bf16.msra.mxu0 %v1689
    %1727 = vmatprep.subr.bf16.mxu0 0
    %1728 = vmatpush2.bf16.msra.mxu0 %v1688
    %1729 = vmatprep.subr.bf16.mxu0 0
    %1730 = vmatpush2.bf16.msra.mxu0 %v1687
    %1731 = vmatprep.subr.bf16.mxu0 0
    %1732 = vmatpush2.bf16.msra.mxu0 %v1686
    %1733 = vmatprep.subr.bf16.mxu0 0
    %1734 = vmatpush2.bf16.msra.mxu0 %v1685
    %1735 = vmatprep.subr.bf16.mxu0 0
    %1736 = vmatpush2.bf16.msra.mxu0 %v1684
    %1737 = vmatprep.subr.bf16.mxu0 0
    %1738 = vmatpush2.bf16.msra.mxu0 %v1683
    %1739 = vmatprep.mubr.bf16.mxu0 %v1567
    %1740 = vmatmul.mubr.bf16.gmra.mxu0 %v1566
    %v1741 = vpop.f32.mrf.mxu0
    %v1742 = vadd.f32 %v1609, %v1741
    %v1743 = vpop.f32.mrf.mxu0
    %v1744 = vpop.f32.mrf.mxu0
    %v1745 = vadd.f32 %v1609, %v1744
    %v1746 = vpop.f32.mrf.mxu0
    %1747 = vmatprep.mubr.bf16.mxu0 %v1569
    %1748 = vmatmul.mubr.bf16.gmra.mxu0 %v1568
    %v1749 = vpop.f32.mrf.mxu0
    %v1750 = vadd.f32 %v1609, %v1749
    %v1751 = vpop.f32.mrf.mxu0
    %v1752 = vpop.f32.mrf.mxu0
    %v1753 = vadd.f32 %v1609, %v1752
    %v1754 = vpop.f32.mrf.mxu0
    %1755 = vmatprep.mubr.bf16.mxu0 %v1571
    %1756 = vmatmul.mubr.bf16.gmra.mxu0 %v1570
    %v1757 = vpop.f32.mrf.mxu0
    %v1758 = vadd.f32 %v1609, %v1757
    %v1759 = vpop.f32.mrf.mxu0
    %v1760 = vpop.f32.mrf.mxu0
    %v1761 = vadd.f32 %v1609, %v1760
    %v1762 = vpop.f32.mrf.mxu0
    %1763 = vdwg.mxu0
    %v1764 = vmax.f32 %v1742, 0.0
    %v1765 = vmax.f32 %v1745, 0.0
    %v1766 = vmax.f32 %v1750, 0.0
    %v1767 = vmax.f32 %v1753, 0.0
    %v1768 = vmax.f32 %v1758, 0.0
    %v1769 = vmax.f32 %v1761, 0.0
    %v1770 = vpack.c.bf16 %v1765, %v1764
    %v1771 = vpack.c.bf16 %v1767, %v1766
    %v1772 = vpack.c.bf16 %v1769, %v1768
    %v1773 = vld [vmem:[#allocation8] sm:$0xf]
    %v1774 = vld [vmem:[#allocation8 + $0x4] sm:$0xf]
    %v1775 = vld [vmem:[#allocation8 + $0x8] sm:$0xf]
    %v1776 = vld [vmem:[#allocation8 + $0xc] sm:$0xf]
    %v1777 = vld [vmem:[#allocation8 + $0x10] sm:$0xf]
    %v1778 = vld [vmem:[#allocation8 + $0x14] sm:$0xf]
    %v1779 = vld [vmem:[#allocation8 + $0x18] sm:$0xf]
    %v1780 = vld [vmem:[#allocation8 + $0x1c] sm:$0xf]
    %v1781 = vld [vmem:[#allocation8 + $0x20] sm:$0xf]
    %v1782 = vld [vmem:[#allocation8 + $0x24] sm:$0xf]
    %v1783 = vld [vmem:[#allocation8 + $0x28] sm:$0xf]
    %v1784 = vld [vmem:[#allocation8 + $0x2c] sm:$0xf]
    %v1785 = vld [vmem:[#allocation8 + $0x30] sm:$0xf]
    %v1786 = vld [vmem:[#allocation8 + $0x34] sm:$0xf]
    %v1787 = vld [vmem:[#allocation8 + $0x38] sm:$0xf]
    %v1788 = vld [vmem:[#allocation8 + $0x3c] sm:$0xf]
    %v1789 = vld [vmem:[%s6] sm:$0x1]
    %v1791 = vlaneseq
    %v1792 = vshrl.u32 %v1791, 7
    %v1793 = vsub.s32 0, %v1792
    %v1794 = vrot.slane %v1789, %v1793
    %v1812 = vunpack.c.l.b16 %v1773
    %v1813 = vunpack.c.l.b16 %v1774
    %v1814 = vunpack.c.l.b16 %v1775
    %v1815 = vunpack.c.l.b16 %v1776
    %v1816 = vunpack.c.l.b16 %v1777
    %v1817 = vunpack.c.l.b16 %v1778
    %v1818 = vunpack.c.l.b16 %v1779
    %v1819 = vunpack.c.l.b16 %v1780
    %v1820 = vunpack.c.l.b16 %v1781
    %v1821 = vunpack.c.l.b16 %v1782
    %v1822 = vunpack.c.l.b16 %v1783
    %v1823 = vunpack.c.l.b16 %v1784
    %v1824 = vunpack.c.l.b16 %v1785
    %v1825 = vunpack.c.l.b16 %v1786
    %v1826 = vunpack.c.l.b16 %v1787
    %v1827 = vunpack.c.l.b16 %v1788
    %v1828 = vpack.c.b16 %v1813, %v1812
    %v1829 = vpack.c.b16 %v1815, %v1814
    %v1830 = vpack.c.b16 %v1817, %v1816
    %v1831 = vpack.c.b16 %v1819, %v1818
    %v1832 = vpack.c.b16 %v1821, %v1820
    %v1833 = vpack.c.b16 %v1823, %v1822
    %v1834 = vpack.c.b16 %v1825, %v1824
    %v1835 = vpack.c.b16 %v1827, %v1826
    %1844 = vmatprep.subr.bf16.mxu0 0
    %1845 = vmatpush1.bf16.msra.mxu0 %v1835
    %1846 = vmatprep.subr.bf16.mxu0 0
    %1847 = vmatpush1.bf16.msra.mxu0 %v1834
    %1848 = vmatprep.subr.bf16.mxu0 0
    %1849 = vmatpush1.bf16.msra.mxu0 %v1833
    %1850 = vmatprep.subr.bf16.mxu0 0
    %1851 = vmatpush1.bf16.msra.mxu0 %v1832
    %1852 = vmatprep.subr.bf16.mxu0 0
    %1853 = vmatpush1.bf16.msra.mxu0 %v1831
    %1854 = vmatprep.subr.bf16.mxu0 0
    %1855 = vmatpush1.bf16.msra.mxu0 %v1830
    %1856 = vmatprep.subr.bf16.mxu0 0
    %1857 = vmatpush1.bf16.msra.mxu0 %v1829
    %1858 = vmatprep.subr.bf16.mxu0 0
    %1859 = vmatpush1.bf16.msra.mxu0 %v1828
    %1860 = vmatprep.subr.bf16.mxu0 0
    %1861 = vmatpush2.bf16.msra.mxu0 0
    %1862 = vmatprep.subr.bf16.mxu0 0
    %1863 = vmatpush2.bf16.msra.mxu0 0
    %1864 = vmatprep.subr.bf16.mxu0 0
    %1865 = vmatpush2.bf16.msra.mxu0 0
    %1866 = vmatprep.subr.bf16.mxu0 0
    %1867 = vmatpush2.bf16.msra.mxu0 0
    %1868 = vmatprep.subr.bf16.mxu0 0
    %1869 = vmatpush2.bf16.msra.mxu0 0
    %1870 = vmatprep.subr.bf16.mxu0 0
    %1871 = vmatpush2.bf16.msra.mxu0 0
    %1872 = vmatprep.subr.bf16.mxu0 0
    %1873 = vmatpush2.bf16.msra.mxu0 0
    %1874 = vmatprep.subr.bf16.mxu0 0
    %1875 = vmatpush2.bf16.msra.mxu0 0
    %1876 = vmatprep.mubr.bf16.mxu0 0
    %1877 = vmatmul.mubr.bf16.gmra.mxu0 %v1770
    %v1878 = vpop.f32.mrf.mxu0
    %v1879 = vadd.f32 %v1794, %v1878
    %v1880 = vpop.f32.mrf.mxu0
    %v1881 = vpop.f32.mrf.mxu0
    %v1882 = vadd.f32 %v1794, %v1881
    %v1883 = vpop.f32.mrf.mxu0
    %1884 = vmatprep.mubr.bf16.mxu0 0
    %1885 = vmatmul.mubr.bf16.gmra.mxu0 %v1771
    %v1886 = vpop.f32.mrf.mxu0
    %v1887 = vadd.f32 %v1794, %v1886
    %v1888 = vpop.f32.mrf.mxu0
    %v1889 = vpop.f32.mrf.mxu0
    %v1890 = vadd.f32 %v1794, %v1889
    %v1891 = vpop.f32.mrf.mxu0
    %1892 = vmatprep.mubr.bf16.mxu0 0
    %1893 = vmatmul.mubr.bf16.gmra.mxu0 %v1772
    %v1894 = vpop.f32.mrf.mxu0
    %v1895 = vadd.f32 %v1794, %v1894
    %v1896 = vpop.f32.mrf.mxu0
    %v1897 = vpop.f32.mrf.mxu0
    %v1898 = vadd.f32 %v1794, %v1897
    %v1899 = vpop.f32.mrf.mxu0
    %1900 = vdwg.mxu0
    %1901 = vst [vmem:[#allocation10] sm:$0xff] %v1879
    %1902 = vst [vmem:[#allocation10 + $0x8] sm:$0xff] %v1882
    %1903 = vst [vmem:[#allocation10 + $0x10] sm:$0xff] %v1887
    %1904 = vst [vmem:[#allocation10 + $0x18] sm:$0xff] %v1890
    %1905 = vst [vmem:[#allocation10 + $0x20] sm:$0xff] %v1895
    %1906 = vst [vmem:[#allocation10 + $0x28] sm:$0xff] %v1898
    // Predicated region
    $region46: #{tpu_custom_call.1} parent=1 // pred_check
      _
    $region47: #{tpu_custom_call.1} parent=1 // pred_check_branch
      %1908 = sbr.rel (0) target = $region49
    $region48: #{tpu_custom_call.1} parent=1 // pred_region
      %s1910 = ssub.s32 768, 768
      %1911 = vsyncadd [#allocation4], %s1910
      %s1912 = sshll.u32 [#allocation10], 4
      %s1913 = int_to_ptr.vmem [resolvable:$true] %s1912
      %1918 = dma.vmem_to_hbm [thread:$0]  %s1913, 768, %s7, [#allocation4], 128, 128, 8
    $region49: #{tpu_custom_call.1} parent=1 // pred_fallthru
      _
    // Predicated region
    $region50: #{tpu_custom_call.1} parent=1 // pred_check
      _
    $region51: #{tpu_custom_call.1} parent=1 // pred_check_branch
      %1920 = sbr.rel (0) target = $region53
    $region52: #{tpu_custom_call.1} parent=1 // pred_region
      %1921 = dma.done [#allocation4], 768
    $region53: #{tpu_custom_call.1} parent=1 // pred_fallthru
      _
    %1922 = vsyncpa [#allocation3], 1
    %1923 = vsyncpa [#allocation6], 1
    %1924 = vsyncpa [#allocation9], 1
    %1925 = vsyncpa [#allocation4], 1

</llo_original>
